<compile_context>
chip_gen: v7x
topology: tpu7x:2x2x1
jax: 0.10.0
libtpu: 0.0.40
codegen_flags: <defaults>
</compile_context>

<pallas_src>
import math
import functools

import jax
import jax.numpy as jnp
from jax.experimental import pallas as pl
from jax.experimental.pallas import tpu as pltpu


# ----------------------------------------------------------------------------
# Pallas kernel: one grid step = one encoder layer applied to (Bb*S, D) rows
# ----------------------------------------------------------------------------
def fused_encoder_kernel(x_ref, wqkv_ref, bqkv_ref, wo_ref, w1_ref, b1_ref,
                         w2_ref, vec_ref, o_ref, act_ref, *, n_heads, bb, seq):
    layer = pl.program_id(1)

    # Load the activation block into the resident VMEM scratch only at layer 0.
    @pl.when(layer == 0)
    def _():
        act_ref[...] = x_ref[...]

    x = act_ref[...]                              # (R, D) f32, R = bb*seq
    R, D = x.shape
    hd = D // n_heads

    vec = vec_ref[0]                              # (6, D): bo, b2, g1, be1, g2, be2

    # ---- fused QKV projection: one (R, D) @ (D, 3D) bf16 MXU matmul ----
    # 1/sqrt(hd) is folded into the q columns of wqkv / bqkv at weight-prep time.
    qkv = jnp.dot(x.astype(jnp.bfloat16), wqkv_ref[0],
                  preferred_element_type=jnp.float32) + bqkv_ref[0]
    qkv = qkv.astype(jnp.bfloat16)                # cast exactly once

    # ---- multi-head self-attention (score/softmax/context per head) ----
    ctx_heads = []
    for h in range(n_heads):                       # static loop; unrolled at trace time
        qh = qkv[:, h * hd:(h + 1) * hd].reshape(bb, seq, hd)
        kh = qkv[:, D + h * hd:D + (h + 1) * hd].reshape(bb, seq, hd)
        vh = qkv[:, 2 * D + h * hd:2 * D + (h + 1) * hd].reshape(bb, seq, hd)

        s = jnp.einsum('bqd,bkd->bqk', qh, kh,
                       preferred_element_type=jnp.float32)      # (bb, seq, seq)
        s = s - jnp.max(s, axis=-1, keepdims=True)
        p = jnp.exp(s)
        p = p * pl.reciprocal(jnp.sum(p, axis=-1, keepdims=True), approx=True)

        ctx_h = jnp.einsum('bqk,bkd->bqd', p.astype(jnp.bfloat16), vh,
                           preferred_element_type=jnp.float32)  # (bb, seq, hd)
        ctx_heads.append(ctx_h.reshape(R, hd).astype(jnp.bfloat16))

    ctx = jnp.concatenate(ctx_heads, axis=-1)      # (R, D) bf16, head-major columns

    # ---- output projection: single (R, D) @ (D, D) matmul, K = H*hd = D ----
    attn = jnp.dot(ctx, wo_ref[0], preferred_element_type=jnp.float32) + vec[0:1, :]

    # ---- residual + LayerNorm 1 (f32) ----
    y = x + attn
    mu = jnp.mean(y, axis=-1, keepdims=True)
    var = jnp.mean((y - mu) ** 2, axis=-1, keepdims=True)
    y = (y - mu) * jax.lax.rsqrt(var + 1e-5) * vec[2:3, :] + vec[3:4, :]

    # ---- position-wise feed-forward (bf16 matmuls, f32 accumulation) ----
    h1 = jnp.dot(y.astype(jnp.bfloat16), w1_ref[0],
                 preferred_element_type=jnp.float32) + b1_ref[0]
    h1 = jnp.maximum(h1, 0.0)
    ff = jnp.dot(h1.astype(jnp.bfloat16), w2_ref[0],
                 preferred_element_type=jnp.float32) + vec[1:2, :]

    # ---- residual + LayerNorm 2 (f32) ----
    z = y + ff
    mu2 = jnp.mean(z, axis=-1, keepdims=True)
    var2 = jnp.mean((z - mu2) ** 2, axis=-1, keepdims=True)
    z = (z - mu2) * jax.lax.rsqrt(var2 + 1e-5) * vec[4:5, :] + vec[5:6, :]

    # Carry the activation in VMEM across the layer axis; write HBM only at the end.
    act_ref[...] = z

    @pl.when(layer == pl.num_programs(1) - 1)
    def _():
        o_ref[...] = z.astype(o_ref.dtype)


# ----------------------------------------------------------------------------
# Wrapper helpers
# ----------------------------------------------------------------------------
def _pick_batch_block(B, S, target_rows=256):
    """Largest useful batch block: divisor of B, (Bb*S) % 8 == 0 (or full)."""
    best = B
    for cand in range(1, B + 1):
        if B % cand:
            continue
        if (cand * S) % 8 and cand != B:
            continue
        best = cand
        if cand * S >= target_rows:
            break
    return best


def _pick_vmem_limit():
    """Explicit VMEM budget (default scoped 16/32 MiB is too small at real sizes)."""
    try:
        cap = int(pltpu.get_tpu_info().vmem_capacity_bytes)
    except Exception:
        cap = 64 * 1024 * 1024          # conservative (v7x-sized) fallback
    return int(min(cap * 7 // 8, 112 * 1024 * 1024))


def encoder_layers_call(x, packed, n_heads, *, batch_block=None):
    """x: (B, S, D) float32; packed: stacked per-layer weights (leading n_layers)."""
    B, S, D = x.shape
    L = packed["wqkv"].shape[0]
    d_ff = packed["w1"].shape[-1]

    bb = _pick_batch_block(B, S) if batch_block is None else batch_block
    assert B % bb == 0
    R = bb * S

    names = ("wqkv", "bqkv", "wo", "w1", "b1", "w2", "vec")
    weights = [packed[n] for n in names]

    def wspec(w):
        nd = w.ndim

        def idx(b, l):
            return (l,) + (0,) * (nd - 1)

        return pl.BlockSpec((1,) + tuple(w.shape[1:]), idx)

    in_specs = [pl.BlockSpec((R, D), lambda b, l: (b, 0))]
    in_specs += [wspec(w) for w in weights]

    kernel = functools.partial(fused_encoder_kernel, n_heads=n_heads, bb=bb, seq=S)

    # Advisory cost estimate for XLA scheduling around the fused call.
    flops = int(2 * L * B * S * (4 * D * D + 2 * S * D + 2 * D * d_ff))
    transcendentals = int(L * B * n_heads * S * S)
    weight_bytes = sum(int(w.size) * int(w.dtype.itemsize) for w in weights)
    bytes_accessed = int(2 * B * S * D * 4 + (B // bb) * weight_bytes)

    out = pl.pallas_call(
        kernel,
        out_shape=jax.ShapeDtypeStruct((B * S, D), jnp.float32),
        grid_spec=pltpu.PrefetchScalarGridSpec(
            num_scalar_prefetch=0,
            grid=(B // bb, L),
            in_specs=in_specs,
            out_specs=pl.BlockSpec((R, D), lambda b, l: (b, 0)),
            scratch_shapes=[pltpu.VMEM((R, D), jnp.float32)],
        ),
        compiler_params=pltpu.CompilerParams(
            dimension_semantics=("parallel", "arbitrary"),
            vmem_limit_bytes=_pick_vmem_limit(),
        ),
        cost_estimate=pl.CostEstimate(
            flops=flops, transcendentals=transcendentals,
            bytes_accessed=bytes_accessed),
    )(x.reshape(B * S, D), *weights)

    return out.reshape(B, S, D)


# ----------------------------------------------------------------------------
# Parameter init (deterministic, synthetic) and packing for the kernel
# ----------------------------------------------------------------------------
def init_layer_params(key, d_model, d_ff):
    ks = jax.random.split(key, 8)
    s = 0.05
    wqkv = s * jax.random.normal(ks[0], (d_model, 3 * d_model), jnp.float32)
    bqkv = 0.01 * jax.random.normal(ks[1], (3 * d_model,), jnp.float32)
    return {
        "wq": wqkv[:, :d_model],
        "wk": wqkv[:, d_model:2 * d_model],
        "wv": wqkv[:, 2 * d_model:],
        "bq": bqkv[:d_model],
        "bk": bqkv[d_model:2 * d_model],
        "bv": bqkv[2 * d_model:],
        "wo": s * jax.random.normal(ks[2], (d_model, d_model), jnp.float32),
        "bo": 0.01 * jax.random.normal(ks[3], (d_model,), jnp.float32),
        "w1": s * jax.random.normal(ks[4], (d_model, d_ff), jnp.float32),
        "b1": 0.01 * jax.random.normal(ks[5], (d_ff,), jnp.float32),
        "w2": s * jax.random.normal(ks[6], (d_ff, d_model), jnp.float32),
        "b2": 0.01 * jax.random.normal(ks[7], (d_model,), jnp.float32),
        "g1": jnp.ones((d_model,), jnp.float32),
        "be1": jnp.zeros((d_model,), jnp.float32),
        "g2": jnp.ones((d_model,), jnp.float32),
        "be2": jnp.zeros((d_model,), jnp.float32),
    }


def prepare_kernel_params(layer_params, n_heads):
    """Stack + pack per-layer params into the layout the fused kernel consumes."""
    d_model = layer_params[0]["wq"].shape[0]
    scale = 1.0 / math.sqrt(d_model // n_heads)   # folded into wq / bq
    packed = {k: [] for k in ("wqkv", "bqkv", "wo", "w1", "b1", "w2", "vec")}
    for lp in layer_params:
        wqkv = jnp.concatenate([lp["wq"] * scale, lp["wk"], lp["wv"]], axis=1)
        bqkv = jnp.concatenate([lp["bq"] * scale, lp["bk"], lp["bv"]], axis=0)
        packed["wqkv"].append(wqkv.astype(jnp.bfloat16))          # (D, 3D)
        packed["bqkv"].append(bqkv.reshape(1, 3 * d_model))       # (1, 3D) f32
        packed["wo"].append(lp["wo"].astype(jnp.bfloat16))        # (D, D)
        packed["w1"].append(lp["w1"].astype(jnp.bfloat16))        # (D, d_ff)
        packed["b1"].append(lp["b1"].reshape(1, -1))               # (1, d_ff) f32
        packed["w2"].append(lp["w2"].astype(jnp.bfloat16))        # (d_ff, D)
        packed["vec"].append(jnp.stack(                            # (6, D) f32
            [lp["bo"], lp["b2"], lp["g1"], lp["be1"], lp["g2"], lp["be2"]], axis=0))
    return {k: jnp.stack(v, axis=0) for k, v in packed.items()}


def make_positional_encoding(max_len, d_model):
    position = jnp.arange(max_len, dtype=jnp.float32)[:, None]
    div_term = jnp.exp(jnp.arange(0, d_model, 2, dtype=jnp.float32)
                       * (-math.log(10000.0) / d_model))
    pe = jnp.zeros((max_len, d_model), jnp.float32)
    pe = pe.at[:, 0::2].set(jnp.sin(position * div_term))
    pe = pe.at[:, 1::2].set(jnp.cos(position * div_term))
    return pe


def encoder_forward(src_tokens, embedding, pe, packed_params, d_model, n_heads):
    # Embedding lookup * sqrt(d_model) + positional encoding stay in plain JAX (gather glue).
    x = jnp.take(embedding, src_tokens, axis=0) * jnp.sqrt(jnp.float32(d_model))
    x = x + pe[None, :x.shape[1], :]
    # TODO(synk): dropout layers are identity (eval / inference semantics).
    # TODO(synk): src_key_padding_mask / attn_mask not supported (module is called without them).
    return encoder_layers_call(x, packed_params, n_heads)


# ----------------------------------------------------------------------------
# Pure-JAX reference (f32) for a correctness sanity check
# ----------------------------------------------------------------------------
def _layer_norm(x, g, b, eps=1e-5):
    mu = jnp.mean(x, axis=-1, keepdims=True)
    var = jnp.mean((x - mu) ** 2, axis=-1, keepdims=True)
    return (x - mu) * jax.lax.rsqrt(var + eps) * g + b


def encoder_reference(src_tokens, embedding, pe, layer_params, d_model, n_heads):
    x = jnp.take(embedding, src_tokens, axis=0) * jnp.sqrt(jnp.float32(d_model))
    x = x + pe[None, :x.shape[1], :]
    B, S, D = x.shape
    hd = D // n_heads
    for lp in layer_params:
        q = (x @ lp["wq"] + lp["bq"]).reshape(B, S, n_heads, hd)
        k = (x @ lp["wk"] + lp["bk"]).reshape(B, S, n_heads, hd)
        v = (x @ lp["wv"] + lp["bv"]).reshape(B, S, n_heads, hd)
        s = jnp.einsum('bqhd,bkhd->bhqk', q, k) / math.sqrt(hd)
        p = jax.nn.softmax(s, axis=-1)
        ctx = jnp.einsum('bhqk,bkhd->bqhd', p, v).reshape(B, S, D)
        attn = ctx @ lp["wo"] + lp["bo"]
        y = _layer_norm(x + attn, lp["g1"], lp["be1"])
        h1 = jnp.maximum(y @ lp["w1"] + lp["b1"], 0.0)
        ff = h1 @ lp["w2"] + lp["b2"]
        x = _layer_norm(y + ff, lp["g2"], lp["be2"])
    return x


# ----------------------------------------------------------------------------
if __name__ == "__main__":
    # small config consistent with the module's forward
    input_dim = 50      # vocab size
    d_model = 32
    n_layers = 2
    n_heads = 4
    d_ff = 64
    max_len = 64
    B, S = 2, 8

    key = jax.random.PRNGKey(0)
    k_emb, k_tok, *k_layers = jax.random.split(key, 2 + n_layers)

    embedding = 0.05 * jax.random.normal(k_emb, (input_dim, d_model), jnp.float32)
    pe = make_positional_encoding(max_len, d_model)
    layer_params = [init_layer_params(k, d_model, d_ff) for k in k_layers]
    packed_params = prepare_kernel_params(layer_params, n_heads)

    src = jax.random.randint(k_tok, (B, S), 0, input_dim, dtype=jnp.int32)

    out = encoder_forward(src, embedding, pe, packed_params, d_model, n_heads)
    out = jax.block_until_ready(out)
    assert out.shape == (B, S, d_model), out.shape
    assert bool(jnp.all(jnp.isfinite(out)))

    # Sanity check against a pure-JAX f32 reference (loose tol: kernel matmuls are bf16,
    # softmax denominator uses the approximate EUP reciprocal).
    ref = encoder_reference(src, embedding, pe, layer_params, d_model, n_heads)
    max_err = float(jnp.max(jnp.abs(out - ref)))
    assert max_err < 0.2, f"max abs error vs reference: {max_err}"

    print("KERNEL_OK")
</pallas_src>

<mosaic_0001>
module attributes {stable_mosaic.version = 11 : i64} {
  func.func @fused_encoder_kernel(%arg0: i32, %arg1: i32, %arg2: memref<16x32xf32, #tpu.memory_space<vmem>>, %arg3: memref<1x32x96xbf16, #tpu.memory_space<vmem>>, %arg4: memref<1x1x96xf32, #tpu.memory_space<vmem>>, %arg5: memref<1x32x32xbf16, #tpu.memory_space<vmem>>, %arg6: memref<1x32x64xbf16, #tpu.memory_space<vmem>>, %arg7: memref<1x1x64xf32, #tpu.memory_space<vmem>>, %arg8: memref<1x64x32xbf16, #tpu.memory_space<vmem>>, %arg9: memref<1x6x32xf32, #tpu.memory_space<vmem>>, %arg10: memref<16x32xf32, #tpu.memory_space<vmem>>, %arg11: memref<16x32xf32, #tpu.memory_space<vmem>>) attributes {dimension_semantics = [#tpu.dimension_semantics<parallel>, #tpu.dimension_semantics<arbitrary>], iteration_bounds = array<i64: 1, 2>, scalar_prefetch = 0 : i64, scratch_operands = 1 : i64, tpu.core_type = #tpu.core_type<tc>, window_params = [{transform_indices = @transform_0, window_bounds = array<i64: 16, 32>}, {transform_indices = @transform_1, window_bounds = array<i64: 1, 32, 96>}, {transform_indices = @transform_2, window_bounds = array<i64: 1, 1, 96>}, {transform_indices = @transform_3, window_bounds = array<i64: 1, 32, 32>}, {transform_indices = @transform_4, window_bounds = array<i64: 1, 32, 64>}, {transform_indices = @transform_5, window_bounds = array<i64: 1, 1, 64>}, {transform_indices = @transform_6, window_bounds = array<i64: 1, 64, 32>}, {transform_indices = @transform_7, window_bounds = array<i64: 1, 6, 32>}, {transform_indices = @transform_8, window_bounds = array<i64: 16, 32>}]} {
    %c0_i32 = arith.constant 0 : i32
    %0 = arith.cmpi eq, %arg1, %c0_i32 : i32
    %1 = arith.extui %0 : i1 to i32
    %c0_i32_0 = arith.constant 0 : i32
    %2 = arith.cmpi ne, %1, %c0_i32_0 : i32
    scf.if %2 {
      %c0_56 = arith.constant 0 : index
      %c0_57 = arith.constant 0 : index
      %177 = vector.load %arg2[%c0_56, %c0_57] : memref<16x32xf32, #tpu.memory_space<vmem>>, vector<16x32xf32>
      %c0_58 = arith.constant 0 : index
      %c0_59 = arith.constant 0 : index
      %178 = vector.load %arg11[%c0_58, %c0_59] : memref<16x32xf32, #tpu.memory_space<vmem>>, vector<16x32xf32>
      tpu.vector_store %arg11[%c0_58, %c0_59], %177 {strides = array<i32>} : memref<16x32xf32, #tpu.memory_space<vmem>>, vector<16x32xf32>,
    } else {
    }
    %c0 = arith.constant 0 : index
    %c0_1 = arith.constant 0 : index
    %3 = vector.load %arg11[%c0, %c0_1] : memref<16x32xf32, #tpu.memory_space<vmem>>, vector<16x32xf32>
    %c0_2 = arith.constant 0 : index
    %c0_3 = arith.constant 0 : index
    %c0_4 = arith.constant 0 : index
    %4 = vector.load %arg9[%c0_2, %c0_3, %c0_4] : memref<1x6x32xf32, #tpu.memory_space<vmem>>, vector<1x6x32xf32>
    %5 = vector.shape_cast %4 : vector<1x6x32xf32> to vector<6x32xf32>
    %6 = arith.truncf %3 : vector<16x32xf32> to vector<16x32xbf16>
    %c0_5 = arith.constant 0 : index
    %c0_6 = arith.constant 0 : index
    %c0_7 = arith.constant 0 : index
    %7 = vector.load %arg3[%c0_5, %c0_6, %c0_7] : memref<1x32x96xbf16, #tpu.memory_space<vmem>>, vector<1x32x96xbf16>
    %8 = vector.shape_cast %7 : vector<1x32x96xbf16> to vector<32x96xbf16>
    %cst = arith.constant dense<0.000000e+00> : vector<16x96xf32>
    %9 = tpu.matmul %6, %8, %cst {dimension_numbers = #tpu.dot_dimension_numbers<[1], [0], [0], [1], [0, 0, 1, 1], [], []>} : vector<16x32xbf16>, vector<32x96xbf16>, vector<16x96xf32> -> vector<16x96xf32>
    %c0_8 = arith.constant 0 : index
    %c0_9 = arith.constant 0 : index
    %c0_10 = arith.constant 0 : index
    %10 = vector.load %arg4[%c0_8, %c0_9, %c0_10] : memref<1x1x96xf32, #tpu.memory_space<vmem>>, vector<1x1x96xf32>
    %11 = vector.shape_cast %10 : vector<1x1x96xf32> to vector<1x96xf32>
    %12 = vector.broadcast %11 : vector<1x96xf32> to vector<16x96xf32>
    %13 = arith.addf %9, %12 : vector<16x96xf32>
    %14 = arith.truncf %13 : vector<16x96xf32> to vector<16x96xbf16>
    %15 = vector.extract_strided_slice %14 {offsets = [0, 0], sizes = [16, 8], strides = [1, 1]} : vector<16x96xbf16> to vector<16x8xbf16>
    %16 = vector.shape_cast %15 : vector<16x8xbf16> to vector<2x8x8xbf16>
    %17 = vector.extract_strided_slice %14 {offsets = [0, 32], sizes = [16, 8], strides = [1, 1]} : vector<16x96xbf16> to vector<16x8xbf16>
    %18 = vector.shape_cast %17 : vector<16x8xbf16> to vector<2x8x8xbf16>
    %19 = vector.extract_strided_slice %14 {offsets = [0, 64], sizes = [16, 8], strides = [1, 1]} : vector<16x96xbf16> to vector<16x8xbf16>
    %20 = vector.shape_cast %19 : vector<16x8xbf16> to vector<2x8x8xbf16>
    "tpu.trace_start"() <{level = 10 : i32, message = "bqd,bkd->bqk"}> : () -> ()
    %cst_11 = arith.constant dense<0.000000e+00> : vector<2x8x8xf32>
    %21 = tpu.matmul %16, %18, %cst_11 {dimension_numbers = #tpu.dot_dimension_numbers<[2], [2], [1], [1], [0, 0, 0, 1, 1, 1], [0], [0]>} : vector<2x8x8xbf16>, vector<2x8x8xbf16>, vector<2x8x8xf32> -> vector<2x8x8xf32>
    "tpu.trace_stop"() : () -> ()
    %cst_12 = arith.constant dense<0xFF800000> : vector<2x8xf32>
    %22 = vector.multi_reduction <maximumf>, %21, %cst_12 [2] : vector<2x8x8xf32> to vector<2x8xf32>
    %23 = vector.shape_cast %22 : vector<2x8xf32> to vector<2x8x1xf32>
    %24 = vector.broadcast %23 : vector<2x8x1xf32> to vector<2x8x8xf32>
    %25 = arith.subf %21, %24 : vector<2x8x8xf32>
    %26 = math.exp %25 : vector<2x8x8xf32>
    %cst_13 = arith.constant dense<0.000000e+00> : vector<2x8xf32>
    %27 = vector.multi_reduction <add>, %26, %cst_13 [2] : vector<2x8x8xf32> to vector<2x8xf32>
    %28 = vector.shape_cast %27 : vector<2x8xf32> to vector<2x8x1xf32>
    %29 = tpu.reciprocal %28 {approx = true} : vector<2x8x1xf32> -> vector<2x8x1xf32>
    %30 = vector.broadcast %29 : vector<2x8x1xf32> to vector<2x8x8xf32>
    %31 = arith.mulf %26, %30 : vector<2x8x8xf32>
    %32 = arith.truncf %31 : vector<2x8x8xf32> to vector<2x8x8xbf16>
    "tpu.trace_start"() <{level = 10 : i32, message = "bqk,bkd->bqd"}> : () -> ()
    %cst_14 = arith.constant dense<0.000000e+00> : vector<2x8x8xf32>
    %33 = tpu.matmul %32, %20, %cst_14 {dimension_numbers = #tpu.dot_dimension_numbers<[2], [1], [1], [2], [0, 0, 0, 1, 1, 2], [0], [0]>} : vector<2x8x8xbf16>, vector<2x8x8xbf16>, vector<2x8x8xf32> -> vector<2x8x8xf32>
    "tpu.trace_stop"() : () -> ()
    %34 = vector.shape_cast %33 : vector<2x8x8xf32> to vector<16x8xf32>
    %35 = arith.truncf %34 : vector<16x8xf32> to vector<16x8xbf16>
    %36 = vector.extract_strided_slice %14 {offsets = [0, 8], sizes = [16, 8], strides = [1, 1]} : vector<16x96xbf16> to vector<16x8xbf16>
    %37 = vector.shape_cast %36 : vector<16x8xbf16> to vector<2x8x8xbf16>
    %38 = vector.extract_strided_slice %14 {offsets = [0, 40], sizes = [16, 8], strides = [1, 1]} : vector<16x96xbf16> to vector<16x8xbf16>
    %39 = vector.shape_cast %38 : vector<16x8xbf16> to vector<2x8x8xbf16>
    %40 = vector.extract_strided_slice %14 {offsets = [0, 72], sizes = [16, 8], strides = [1, 1]} : vector<16x96xbf16> to vector<16x8xbf16>
    %41 = vector.shape_cast %40 : vector<16x8xbf16> to vector<2x8x8xbf16>
    "tpu.trace_start"() <{level = 10 : i32, message = "bqd,bkd->bqk"}> : () -> ()
    %cst_15 = arith.constant dense<0.000000e+00> : vector<2x8x8xf32>
    %42 = tpu.matmul %37, %39, %cst_15 {dimension_numbers = #tpu.dot_dimension_numbers<[2], [2], [1], [1], [0, 0, 0, 1, 1, 1], [0], [0]>} : vector<2x8x8xbf16>, vector<2x8x8xbf16>, vector<2x8x8xf32> -> vector<2x8x8xf32>
    "tpu.trace_stop"() : () -> ()
    %cst_16 = arith.constant dense<0xFF800000> : vector<2x8xf32>
    %43 = vector.multi_reduction <maximumf>, %42, %cst_16 [2] : vector<2x8x8xf32> to vector<2x8xf32>
    %44 = vector.shape_cast %43 : vector<2x8xf32> to vector<2x8x1xf32>
    %45 = vector.broadcast %44 : vector<2x8x1xf32> to vector<2x8x8xf32>
    %46 = arith.subf %42, %45 : vector<2x8x8xf32>
    %47 = math.exp %46 : vector<2x8x8xf32>
    %cst_17 = arith.constant dense<0.000000e+00> : vector<2x8xf32>
    %48 = vector.multi_reduction <add>, %47, %cst_17 [2] : vector<2x8x8xf32> to vector<2x8xf32>
    %49 = vector.shape_cast %48 : vector<2x8xf32> to vector<2x8x1xf32>
    %50 = tpu.reciprocal %49 {approx = true} : vector<2x8x1xf32> -> vector<2x8x1xf32>
    %51 = vector.broadcast %50 : vector<2x8x1xf32> to vector<2x8x8xf32>
    %52 = arith.mulf %47, %51 : vector<2x8x8xf32>
    %53 = arith.truncf %52 : vector<2x8x8xf32> to vector<2x8x8xbf16>
    "tpu.trace_start"() <{level = 10 : i32, message = "bqk,bkd->bqd"}> : () -> ()
    %cst_18 = arith.constant dense<0.000000e+00> : vector<2x8x8xf32>
    %54 = tpu.matmul %53, %41, %cst_18 {dimension_numbers = #tpu.dot_dimension_numbers<[2], [1], [1], [2], [0, 0, 0, 1, 1, 2], [0], [0]>} : vector<2x8x8xbf16>, vector<2x8x8xbf16>, vector<2x8x8xf32> -> vector<2x8x8xf32>
    "tpu.trace_stop"() : () -> ()
    %55 = vector.shape_cast %54 : vector<2x8x8xf32> to vector<16x8xf32>
    %56 = arith.truncf %55 : vector<16x8xf32> to vector<16x8xbf16>
    %57 = vector.extract_strided_slice %14 {offsets = [0, 16], sizes = [16, 8], strides = [1, 1]} : vector<16x96xbf16> to vector<16x8xbf16>
    %58 = vector.shape_cast %57 : vector<16x8xbf16> to vector<2x8x8xbf16>
    %59 = vector.extract_strided_slice %14 {offsets = [0, 48], sizes = [16, 8], strides = [1, 1]} : vector<16x96xbf16> to vector<16x8xbf16>
    %60 = vector.shape_cast %59 : vector<16x8xbf16> to vector<2x8x8xbf16>
    %61 = vector.extract_strided_slice %14 {offsets = [0, 80], sizes = [16, 8], strides = [1, 1]} : vector<16x96xbf16> to vector<16x8xbf16>
    %62 = vector.shape_cast %61 : vector<16x8xbf16> to vector<2x8x8xbf16>
    "tpu.trace_start"() <{level = 10 : i32, message = "bqd,bkd->bqk"}> : () -> ()
    %cst_19 = arith.constant dense<0.000000e+00> : vector<2x8x8xf32>
    %63 = tpu.matmul %58, %60, %cst_19 {dimension_numbers = #tpu.dot_dimension_numbers<[2], [2], [1], [1], [0, 0, 0, 1, 1, 1], [0], [0]>} : vector<2x8x8xbf16>, vector<2x8x8xbf16>, vector<2x8x8xf32> -> vector<2x8x8xf32>
    "tpu.trace_stop"() : () -> ()
    %cst_20 = arith.constant dense<0xFF800000> : vector<2x8xf32>
    %64 = vector.multi_reduction <maximumf>, %63, %cst_20 [2] : vector<2x8x8xf32> to vector<2x8xf32>
    %65 = vector.shape_cast %64 : vector<2x8xf32> to vector<2x8x1xf32>
    %66 = vector.broadcast %65 : vector<2x8x1xf32> to vector<2x8x8xf32>
    %67 = arith.subf %63, %66 : vector<2x8x8xf32>
    %68 = math.exp %67 : vector<2x8x8xf32>
    %cst_21 = arith.constant dense<0.000000e+00> : vector<2x8xf32>
    %69 = vector.multi_reduction <add>, %68, %cst_21 [2] : vector<2x8x8xf32> to vector<2x8xf32>
    %70 = vector.shape_cast %69 : vector<2x8xf32> to vector<2x8x1xf32>
    %71 = tpu.reciprocal %70 {approx = true} : vector<2x8x1xf32> -> vector<2x8x1xf32>
    %72 = vector.broadcast %71 : vector<2x8x1xf32> to vector<2x8x8xf32>
    %73 = arith.mulf %68, %72 : vector<2x8x8xf32>
    %74 = arith.truncf %73 : vector<2x8x8xf32> to vector<2x8x8xbf16>
    "tpu.trace_start"() <{level = 10 : i32, message = "bqk,bkd->bqd"}> : () -> ()
    %cst_22 = arith.constant dense<0.000000e+00> : vector<2x8x8xf32>
    %75 = tpu.matmul %74, %62, %cst_22 {dimension_numbers = #tpu.dot_dimension_numbers<[2], [1], [1], [2], [0, 0, 0, 1, 1, 2], [0], [0]>} : vector<2x8x8xbf16>, vector<2x8x8xbf16>, vector<2x8x8xf32> -> vector<2x8x8xf32>
    "tpu.trace_stop"() : () -> ()
    %76 = vector.shape_cast %75 : vector<2x8x8xf32> to vector<16x8xf32>
    %77 = arith.truncf %76 : vector<16x8xf32> to vector<16x8xbf16>
    %78 = vector.extract_strided_slice %14 {offsets = [0, 24], sizes = [16, 8], strides = [1, 1]} : vector<16x96xbf16> to vector<16x8xbf16>
    %79 = vector.shape_cast %78 : vector<16x8xbf16> to vector<2x8x8xbf16>
    %80 = vector.extract_strided_slice %14 {offsets = [0, 56], sizes = [16, 8], strides = [1, 1]} : vector<16x96xbf16> to vector<16x8xbf16>
    %81 = vector.shape_cast %80 : vector<16x8xbf16> to vector<2x8x8xbf16>
    %82 = vector.extract_strided_slice %14 {offsets = [0, 88], sizes = [16, 8], strides = [1, 1]} : vector<16x96xbf16> to vector<16x8xbf16>
    %83 = vector.shape_cast %82 : vector<16x8xbf16> to vector<2x8x8xbf16>
    "tpu.trace_start"() <{level = 10 : i32, message = "bqd,bkd->bqk"}> : () -> ()
    %cst_23 = arith.constant dense<0.000000e+00> : vector<2x8x8xf32>
    %84 = tpu.matmul %79, %81, %cst_23 {dimension_numbers = #tpu.dot_dimension_numbers<[2], [2], [1], [1], [0, 0, 0, 1, 1, 1], [0], [0]>} : vector<2x8x8xbf16>, vector<2x8x8xbf16>, vector<2x8x8xf32> -> vector<2x8x8xf32>
    "tpu.trace_stop"() : () -> ()
    %cst_24 = arith.constant dense<0xFF800000> : vector<2x8xf32>
    %85 = vector.multi_reduction <maximumf>, %84, %cst_24 [2] : vector<2x8x8xf32> to vector<2x8xf32>
    %86 = vector.shape_cast %85 : vector<2x8xf32> to vector<2x8x1xf32>
    %87 = vector.broadcast %86 : vector<2x8x1xf32> to vector<2x8x8xf32>
    %88 = arith.subf %84, %87 : vector<2x8x8xf32>
    %89 = math.exp %88 : vector<2x8x8xf32>
    %cst_25 = arith.constant dense<0.000000e+00> : vector<2x8xf32>
    %90 = vector.multi_reduction <add>, %89, %cst_25 [2] : vector<2x8x8xf32> to vector<2x8xf32>
    %91 = vector.shape_cast %90 : vector<2x8xf32> to vector<2x8x1xf32>
    %92 = tpu.reciprocal %91 {approx = true} : vector<2x8x1xf32> -> vector<2x8x1xf32>
    %93 = vector.broadcast %92 : vector<2x8x1xf32> to vector<2x8x8xf32>
    %94 = arith.mulf %89, %93 : vector<2x8x8xf32>
    %95 = arith.truncf %94 : vector<2x8x8xf32> to vector<2x8x8xbf16>
    "tpu.trace_start"() <{level = 10 : i32, message = "bqk,bkd->bqd"}> : () -> ()
    %cst_26 = arith.constant dense<0.000000e+00> : vector<2x8x8xf32>
    %96 = tpu.matmul %95, %83, %cst_26 {dimension_numbers = #tpu.dot_dimension_numbers<[2], [1], [1], [2], [0, 0, 0, 1, 1, 2], [0], [0]>} : vector<2x8x8xbf16>, vector<2x8x8xbf16>, vector<2x8x8xf32> -> vector<2x8x8xf32>
    "tpu.trace_stop"() : () -> ()
    %97 = vector.shape_cast %96 : vector<2x8x8xf32> to vector<16x8xf32>
    %98 = arith.truncf %97 : vector<16x8xf32> to vector<16x8xbf16>
    %99 = tpu.concatenate %35, %56, %77, %98 in 1 : vector<16x8xbf16>, vector<16x8xbf16>, vector<16x8xbf16>, vector<16x8xbf16> -> vector<16x32xbf16>
    %c0_27 = arith.constant 0 : index
    %c0_28 = arith.constant 0 : index
    %c0_29 = arith.constant 0 : index
    %100 = vector.load %arg5[%c0_27, %c0_28, %c0_29] : memref<1x32x32xbf16, #tpu.memory_space<vmem>>, vector<1x32x32xbf16>
    %101 = vector.shape_cast %100 : vector<1x32x32xbf16> to vector<32x32xbf16>
    %cst_30 = arith.constant dense<0.000000e+00> : vector<16x32xf32>
    %102 = tpu.matmul %99, %101, %cst_30 {dimension_numbers = #tpu.dot_dimension_numbers<[1], [0], [0], [1], [0, 0, 1, 1], [], []>} : vector<16x32xbf16>, vector<32x32xbf16>, vector<16x32xf32> -> vector<16x32xf32>
    %103 = vector.extract_strided_slice %5 {offsets = [0, 0], sizes = [1, 32], strides = [1, 1]} : vector<6x32xf32> to vector<1x32xf32>
    %104 = vector.broadcast %103 : vector<1x32xf32> to vector<16x32xf32>
    %105 = arith.addf %102, %104 : vector<16x32xf32>
    %106 = arith.addf %3, %105 : vector<16x32xf32>
    %cst_31 = arith.constant dense<0.000000e+00> : vector<16xf32>
    %107 = vector.multi_reduction <add>, %106, %cst_31 [1] : vector<16x32xf32> to vector<16xf32>
    %108 = vector.shape_cast %107 : vector<16xf32> to vector<16x1xf32>
    %cst_32 = arith.constant 3.200000e+01 : f32
    %109 = vector.broadcast %cst_32 : f32 to vector<16x1xf32>
    %110 = arith.divf %108, %109 : vector<16x1xf32>
    %111 = vector.broadcast %110 : vector<16x1xf32> to vector<16x32xf32>
    %112 = arith.subf %106, %111 : vector<16x32xf32>
    %113 = arith.mulf %112, %112 : vector<16x32xf32>
    %cst_33 = arith.constant dense<0.000000e+00> : vector<16xf32>
    %114 = vector.multi_reduction <add>, %113, %cst_33 [1] : vector<16x32xf32> to vector<16xf32>
    %115 = vector.shape_cast %114 : vector<16xf32> to vector<16x1xf32>
    %cst_34 = arith.constant 3.200000e+01 : f32
    %116 = vector.broadcast %cst_34 : f32 to vector<16x1xf32>
    %117 = arith.divf %115, %116 : vector<16x1xf32>
    %118 = vector.broadcast %110 : vector<16x1xf32> to vector<16x32xf32>
    %119 = arith.subf %106, %118 : vector<16x32xf32>
    %cst_35 = arith.constant 9.99999974E-6 : f32
    %120 = vector.broadcast %cst_35 : f32 to vector<16x1xf32>
    %121 = arith.addf %117, %120 : vector<16x1xf32>
    %122 = math.rsqrt %121 : vector<16x1xf32>
    %123 = vector.broadcast %122 : vector<16x1xf32> to vector<16x32xf32>
    %124 = arith.mulf %119, %123 : vector<16x32xf32>
    %125 = vector.extract_strided_slice %5 {offsets = [2, 0], sizes = [1, 32], strides = [1, 1]} : vector<6x32xf32> to vector<1x32xf32>
    %126 = vector.broadcast %125 : vector<1x32xf32> to vector<16x32xf32>
    %127 = arith.mulf %124, %126 : vector<16x32xf32>
    %128 = vector.extract_strided_slice %5 {offsets = [3, 0], sizes = [1, 32], strides = [1, 1]} : vector<6x32xf32> to vector<1x32xf32>
    %129 = vector.broadcast %128 : vector<1x32xf32> to vector<16x32xf32>
    %130 = arith.addf %127, %129 : vector<16x32xf32>
    %131 = arith.truncf %130 : vector<16x32xf32> to vector<16x32xbf16>
    %c0_36 = arith.constant 0 : index
    %c0_37 = arith.constant 0 : index
    %c0_38 = arith.constant 0 : index
    %132 = vector.load %arg6[%c0_36, %c0_37, %c0_38] : memref<1x32x64xbf16, #tpu.memory_space<vmem>>, vector<1x32x64xbf16>
    %133 = vector.shape_cast %132 : vector<1x32x64xbf16> to vector<32x64xbf16>
    %cst_39 = arith.constant dense<0.000000e+00> : vector<16x64xf32>
    %134 = tpu.matmul %131, %133, %cst_39 {dimension_numbers = #tpu.dot_dimension_numbers<[1], [0], [0], [1], [0, 0, 1, 1], [], []>} : vector<16x32xbf16>, vector<32x64xbf16>, vector<16x64xf32> -> vector<16x64xf32>
    %c0_40 = arith.constant 0 : index
    %c0_41 = arith.constant 0 : index
    %c0_42 = arith.constant 0 : index
    %135 = vector.load %arg7[%c0_40, %c0_41, %c0_42] : memref<1x1x64xf32, #tpu.memory_space<vmem>>, vector<1x1x64xf32>
    %136 = vector.shape_cast %135 : vector<1x1x64xf32> to vector<1x64xf32>
    %137 = vector.broadcast %136 : vector<1x64xf32> to vector<16x64xf32>
    %138 = arith.addf %134, %137 : vector<16x64xf32>
    %cst_43 = arith.constant 0.000000e+00 : f32
    %139 = vector.broadcast %cst_43 : f32 to vector<16x64xf32>
    %140 = arith.maximumf %138, %139 : vector<16x64xf32>
    %141 = arith.truncf %140 : vector<16x64xf32> to vector<16x64xbf16>
    %c0_44 = arith.constant 0 : index
    %c0_45 = arith.constant 0 : index
    %c0_46 = arith.constant 0 : index
    %142 = vector.load %arg8[%c0_44, %c0_45, %c0_46] : memref<1x64x32xbf16, #tpu.memory_space<vmem>>, vector<1x64x32xbf16>
    %143 = vector.shape_cast %142 : vector<1x64x32xbf16> to vector<64x32xbf16>
    %cst_47 = arith.constant dense<0.000000e+00> : vector<16x32xf32>
    %144 = tpu.matmul %141, %143, %cst_47 {dimension_numbers = #tpu.dot_dimension_numbers<[1], [0], [0], [1], [0, 0, 1, 1], [], []>} : vector<16x64xbf16>, vector<64x32xbf16>, vector<16x32xf32> -> vector<16x32xf32>
    %145 = vector.extract_strided_slice %5 {offsets = [1, 0], sizes = [1, 32], strides = [1, 1]} : vector<6x32xf32> to vector<1x32xf32>
    %146 = vector.broadcast %145 : vector<1x32xf32> to vector<16x32xf32>
    %147 = arith.addf %144, %146 : vector<16x32xf32>
    %148 = arith.addf %130, %147 : vector<16x32xf32>
    %cst_48 = arith.constant dense<0.000000e+00> : vector<16xf32>
    %149 = vector.multi_reduction <add>, %148, %cst_48 [1] : vector<16x32xf32> to vector<16xf32>
    %150 = vector.shape_cast %149 : vector<16xf32> to vector<16x1xf32>
    %cst_49 = arith.constant 3.200000e+01 : f32
    %151 = vector.broadcast %cst_49 : f32 to vector<16x1xf32>
    %152 = arith.divf %150, %151 : vector<16x1xf32>
    %153 = vector.broadcast %152 : vector<16x1xf32> to vector<16x32xf32>
    %154 = arith.subf %148, %153 : vector<16x32xf32>
    %155 = arith.mulf %154, %154 : vector<16x32xf32>
    %cst_50 = arith.constant dense<0.000000e+00> : vector<16xf32>
    %156 = vector.multi_reduction <add>, %155, %cst_50 [1] : vector<16x32xf32> to vector<16xf32>
    %157 = vector.shape_cast %156 : vector<16xf32> to vector<16x1xf32>
    %cst_51 = arith.constant 3.200000e+01 : f32
    %158 = vector.broadcast %cst_51 : f32 to vector<16x1xf32>
    %159 = arith.divf %157, %158 : vector<16x1xf32>
    %160 = vector.broadcast %152 : vector<16x1xf32> to vector<16x32xf32>
    %161 = arith.subf %148, %160 : vector<16x32xf32>
    %cst_52 = arith.constant 9.99999974E-6 : f32
    %162 = vector.broadcast %cst_52 : f32 to vector<16x1xf32>
    %163 = arith.addf %159, %162 : vector<16x1xf32>
    %164 = math.rsqrt %163 : vector<16x1xf32>
    %165 = vector.broadcast %164 : vector<16x1xf32> to vector<16x32xf32>
    %166 = arith.mulf %161, %165 : vector<16x32xf32>
    %167 = vector.extract_strided_slice %5 {offsets = [4, 0], sizes = [1, 32], strides = [1, 1]} : vector<6x32xf32> to vector<1x32xf32>
    %168 = vector.broadcast %167 : vector<1x32xf32> to vector<16x32xf32>
    %169 = arith.mulf %166, %168 : vector<16x32xf32>
    %170 = vector.extract_strided_slice %5 {offsets = [5, 0], sizes = [1, 32], strides = [1, 1]} : vector<6x32xf32> to vector<1x32xf32>
    %171 = vector.broadcast %170 : vector<1x32xf32> to vector<16x32xf32>
    %172 = arith.addf %169, %171 : vector<16x32xf32>
    %c0_53 = arith.constant 0 : index
    %c0_54 = arith.constant 0 : index
    %173 = vector.load %arg11[%c0_53, %c0_54] : memref<16x32xf32, #tpu.memory_space<vmem>>, vector<16x32xf32>
    tpu.vector_store %arg11[%c0_53, %c0_54], %172 {strides = array<i32>} : memref<16x32xf32, #tpu.memory_space<vmem>>, vector<16x32xf32>,
    %c1_i32 = arith.constant 1 : i32
    %174 = arith.cmpi eq, %arg1, %c1_i32 : i32
    %175 = arith.extui %174 : i1 to i32
    %c0_i32_55 = arith.constant 0 : i32
    %176 = arith.cmpi ne, %175, %c0_i32_55 : i32
    scf.if %176 {
      %c0_56 = arith.constant 0 : index
      %c0_57 = arith.constant 0 : index
      %177 = vector.load %arg10[%c0_56, %c0_57] : memref<16x32xf32, #tpu.memory_space<vmem>>, vector<16x32xf32>
      tpu.vector_store %arg10[%c0_56, %c0_57], %172 {strides = array<i32>} : memref<16x32xf32, #tpu.memory_space<vmem>>, vector<16x32xf32>,
    } else {
    }
    return
  }
  func.func @transform_0(%arg0: i32, %arg1: i32) -> (i32, i32) {
    %c0_i32 = arith.constant 0 : i32
    %c0_i32_0 = arith.constant 0 : i32
    return %arg0, %c0_i32 : i32, i32
  }
  func.func @transform_1(%arg0: i32, %arg1: i32) -> (i32, i32, i32) {
    %c0_i32 = arith.constant 0 : i32
    %c0_i32_0 = arith.constant 0 : i32
    %c0_i32_1 = arith.constant 0 : i32
    return %arg1, %c0_i32, %c0_i32_0 : i32, i32, i32
  }
  func.func @transform_2(%arg0: i32, %arg1: i32) -> (i32, i32, i32) {
    %c0_i32 = arith.constant 0 : i32
    %c0_i32_0 = arith.constant 0 : i32
    %c0_i32_1 = arith.constant 0 : i32
    return %arg1, %c0_i32, %c0_i32_0 : i32, i32, i32
  }
  func.func @transform_3(%arg0: i32, %arg1: i32) -> (i32, i32, i32) {
    %c0_i32 = arith.constant 0 : i32
    %c0_i32_0 = arith.constant 0 : i32
    %c0_i32_1 = arith.constant 0 : i32
    return %arg1, %c0_i32, %c0_i32_0 : i32, i32, i32
  }
  func.func @transform_4(%arg0: i32, %arg1: i32) -> (i32, i32, i32) {
    %c0_i32 = arith.constant 0 : i32
    %c0_i32_0 = arith.constant 0 : i32
    %c0_i32_1 = arith.constant 0 : i32
    return %arg1, %c0_i32, %c0_i32_0 : i32, i32, i32
  }
  func.func @transform_5(%arg0: i32, %arg1: i32) -> (i32, i32, i32) {
    %c0_i32 = arith.constant 0 : i32
    %c0_i32_0 = arith.constant 0 : i32
    %c0_i32_1 = arith.constant 0 : i32
    return %arg1, %c0_i32, %c0_i32_0 : i32, i32, i32
  }
  func.func @transform_6(%arg0: i32, %arg1: i32) -> (i32, i32, i32) {
    %c0_i32 = arith.constant 0 : i32
    %c0_i32_0 = arith.constant 0 : i32
    %c0_i32_1 = arith.constant 0 : i32
    return %arg1, %c0_i32, %c0_i32_0 : i32, i32, i32
  }
  func.func @transform_7(%arg0: i32, %arg1: i32) -> (i32, i32, i32) {
    %c0_i32 = arith.constant 0 : i32
    %c0_i32_0 = arith.constant 0 : i32
    %c0_i32_1 = arith.constant 0 : i32
    return %arg1, %c0_i32, %c0_i32_0 : i32, i32, i32
  }
  func.func @transform_8(%arg0: i32, %arg1: i32) -> (i32, i32) {
    %c0_i32 = arith.constant 0 : i32
    %c0_i32_0 = arith.constant 0 : i32
    return %arg0, %c0_i32 : i32, i32
  }
}

</mosaic_0001>

<llo_original>
// kernel: tpu_custom_call.1
$region0: #{tpu_custom_call.1}
  #allocation0 [shape = 'u32[]', space=smem, size = 0x4, offset = 0x4, fixed_abs, tag = 'smem constant byte address 0x4 - core index']
  #allocation1 [shape = 'u32[144,128]{1,0:T(1,128)}', space=vmem, size = 0x12000, scoped, tag = 'internal scratch']
  #allocation2 [shape = 'f32[16,32]{1,0:T(8,128)}', space=vmem, size = 0x2000, scoped, tag = 'scratch operand']
  %s0 = inlined_call_operand.vmem [shape: f32[16,32], index: 0, kind: input, shape index: {}]
  %s1 = inlined_call_operand.vmem [shape: bf16[2,32,96], index: 1, kind: input, shape index: {}]
  %s2 = inlined_call_operand.vmem [shape: f32[2,1,96], index: 2, kind: input, shape index: {}]
  %s3 = inlined_call_operand.vmem [shape: bf16[2,32,32], index: 3, kind: input, shape index: {}]
  %s4 = inlined_call_operand.vmem [shape: bf16[2,32,64], index: 4, kind: input, shape index: {}]
  %s5 = inlined_call_operand.hbm [shape: f32[2,1,64], index: 5, kind: input, shape index: {}]
  %s6 = inlined_call_operand.vmem [shape: bf16[2,64,32], index: 6, kind: input, shape index: {}]
  %s7 = inlined_call_operand.vmem [shape: f32[2,6,32], index: 7, kind: input, shape index: {}]
  %s8 = inlined_call_operand.hbm [shape: f32[16,32], index: 8, kind: output, shape index: {}]
  %s9 = sld [smem:[#allocation0]]
  $region77: #{tpu_custom_call.1} parent=0
    _
  %s11 = ssub.s32 1, %s9
  %s12 = scalar_select 0, %s11, %s9
  $region1: #{tpu_custom_call.1} parent=0
    #allocation3 [shape = 'u8[1024]{0}', space=vmem, size = 0x400, scoped, tag = 'input window, operand 5']
    #allocation4 [shape = 's32[2]{0}', space=sflag, size = 0x8, scoped, tag = 'scoped memory for tpu_custom_call.1']
    #allocation5 [shape = 's32[2]{0}', space=sflag, size = 0x8, scoped, tag = 'scoped memory for tpu_custom_call.1']
    #allocation6 [shape = 'u8[8192]{0}', space=vmem, size = 0x2000, scoped, tag = 'output window, operand 0, single buffered']
    %13 = vsyncpa [#allocation4], 0
    %s14 = scalar_lea.sflag [#allocation4], 1
    %15 = vsyncpa %s14, 0
    %16 = vsyncpa [#allocation5], 0
    loop: start=0, step=1, limit=4
    $region2: #{tpu_custom_call.1} parent=1 // loop_pre_header
      _
    $region3: #{tpu_custom_call.1} parent=1 // loop_header
      %s18 = sphi 0, %s22
      %p19 = scmp.ge.s32.totalorder %s18, 4
      %s25 = sphi 0, %s37
      %s26 = sphi 0, %s33
      %s27 = sphi 0, %s25
      %s28 = sphi 0, %s26
      %s29 = sphi 0, %s27
      %s30 = sphi 0, %s28
      %s40 = sphi 0, %s42
      %s43 = sphi 0, %s40
      %s44 = sphi 0, %s43
      %s60 = sphi 0, %s44
      %s66 = sphi 0, %s68
      %s69 = sphi 0, %s66
      %s70 = sphi 0, %s69
      %s86 = sphi 0, %s70
      %s92 = sphi 0, %s94
      %s95 = sphi 0, %s92
      %s96 = sphi 0, %s95
      %s112 = sphi 0, %s96
      %s118 = sphi 0, %s120
      %s121 = sphi 0, %s118
      %s122 = sphi 0, %s121
      %s138 = sphi 0, %s122
      %s144 = sphi 0, %s146
      %s147 = sphi 0, %s144
      %s148 = sphi 0, %s147
      %s164 = sphi 0, %s148
      %s170 = sphi 0, %s172
      %s173 = sphi 0, %s170
      %s174 = sphi 0, %s173
      %s190 = sphi 0, %s174
      %s196 = sphi 0, %s198
      %s199 = sphi 0, %s196
      %s200 = sphi 0, %s199
      %s216 = sphi 0, %s200
      %s222 = sphi 0, %s224
      %s225 = sphi 0, %s222
      %s226 = sphi 0, %s225
      %s242 = sphi 0, %s226
      %s248 = sphi 0, %s250
      %s251 = sphi 0, %s248
      %s252 = sphi 0, %s251
      %s268 = sphi 0, %s252
    $region4: #{tpu_custom_call.1} parent=1 // loop_header_branch
      %21 = sbr.rel (%p19) target = $region8
    $region5: #{tpu_custom_call.1} parent=1 // loop_body
      %s23 = ssub.s32 %s18, 1
      %s24 = ssub.s32 %s18, 2
      %s31 = sadd.s32 1, %s26
      %p32 = scmp.ge.s32.totalorder %s31, 2
      %s33 = scalar_select %p32, 0, %s31
      %s34 = sadd.s32 1, %s25
      %s35 = scalar_select %p32, %s34, %s25
      %p36 = scmp.ge.s32.totalorder %s35, 1
      %s37 = scalar_select %p36, 0, %s35
      %s38 = ssub.s32 %s25, %s37
      %p39 = scmp.eq.s32.totalorder %s38, 0
      %s41 = sadd.s32 %s40, 1
      %s42 = scalar_select %p39, %s40, %s41
      %p45 = pneg %p39
      %p46 = scmp.eq.s32.totalorder %s18, 1
      %p47 = por %p45, %p46
      %p48 = scmp.ne.s32.totalorder %s40, %s43
      %p49 = scmp.eq.s32.totalorder %s18, 0
      %p50 = por %p48, %p49
      %p51 = scmp.ne.s32.totalorder %s40, %s43
      %p52 = scmp.eq.s32.totalorder %s23, 1
      %p53 = por %p51, %p52
      %p54 = scmp.ne.s32.totalorder %s43, %s44
      %p55 = scmp.eq.s32.totalorder %s23, 0
      %p56 = por %p54, %p55
      %p57 = scmp.ne.s32.totalorder %s43, %s44
      %p58 = scmp.eq.s32.totalorder %s24, 1
      %p59 = por %p57, %p58
      %p61 = scmp.ne.s32.totalorder %s44, %s60
      %p62 = scmp.eq.s32.totalorder %s24, 0
      %p63 = por %p61, %p62
      %s64 = ssub.s32 %s26, %s33
      %p65 = scmp.eq.s32.totalorder %s64, 0
      %s67 = sadd.s32 %s66, 1
      %s68 = scalar_select %p65, %s66, %s67
      %p71 = pneg %p65
      %p72 = scmp.eq.s32.totalorder %s18, 1
      %p73 = por %p71, %p72
      %p74 = scmp.ne.s32.totalorder %s66, %s69
      %p75 = scmp.eq.s32.totalorder %s18, 0
      %p76 = por %p74, %p75
      %p77 = scmp.ne.s32.totalorder %s66, %s69
      %p78 = scmp.eq.s32.totalorder %s23, 1
      %p79 = por %p77, %p78
      %p80 = scmp.ne.s32.totalorder %s69, %s70
      %p81 = scmp.eq.s32.totalorder %s23, 0
      %p82 = por %p80, %p81
      %p83 = scmp.ne.s32.totalorder %s69, %s70
      %p84 = scmp.eq.s32.totalorder %s24, 1
      %p85 = por %p83, %p84
      %p87 = scmp.ne.s32.totalorder %s70, %s86
      %p88 = scmp.eq.s32.totalorder %s24, 0
      %p89 = por %p87, %p88
      %s90 = ssub.s32 %s26, %s33
      %p91 = scmp.eq.s32.totalorder %s90, 0
      %s93 = sadd.s32 %s92, 1
      %s94 = scalar_select %p91, %s92, %s93
      %p97 = pneg %p91
      %p98 = scmp.eq.s32.totalorder %s18, 1
      %p99 = por %p97, %p98
      %p100 = scmp.ne.s32.totalorder %s92, %s95
      %p101 = scmp.eq.s32.totalorder %s18, 0
      %p102 = por %p100, %p101
      %p103 = scmp.ne.s32.totalorder %s92, %s95
      %p104 = scmp.eq.s32.totalorder %s23, 1
      %p105 = por %p103, %p104
      %p106 = scmp.ne.s32.totalorder %s95, %s96
      %p107 = scmp.eq.s32.totalorder %s23, 0
      %p108 = por %p106, %p107
      %p109 = scmp.ne.s32.totalorder %s95, %s96
      %p110 = scmp.eq.s32.totalorder %s24, 1
      %p111 = por %p109, %p110
      %p113 = scmp.ne.s32.totalorder %s96, %s112
      %p114 = scmp.eq.s32.totalorder %s24, 0
      %p115 = por %p113, %p114
      %s116 = ssub.s32 %s26, %s33
      %p117 = scmp.eq.s32.totalorder %s116, 0
      %s119 = sadd.s32 %s118, 1
      %s120 = scalar_select %p117, %s118, %s119
      %p123 = pneg %p117
      %p124 = scmp.eq.s32.totalorder %s18, 1
      %p125 = por %p123, %p124
      %p126 = scmp.ne.s32.totalorder %s118, %s121
      %p127 = scmp.eq.s32.totalorder %s18, 0
      %p128 = por %p126, %p127
      %p129 = scmp.ne.s32.totalorder %s118, %s121
      %p130 = scmp.eq.s32.totalorder %s23, 1
      %p131 = por %p129, %p130
      %p132 = scmp.ne.s32.totalorder %s121, %s122
      %p133 = scmp.eq.s32.totalorder %s23, 0
      %p134 = por %p132, %p133
      %p135 = scmp.ne.s32.totalorder %s121, %s122
      %p136 = scmp.eq.s32.totalorder %s24, 1
      %p137 = por %p135, %p136
      %p139 = scmp.ne.s32.totalorder %s122, %s138
      %p140 = scmp.eq.s32.totalorder %s24, 0
      %p141 = por %p139, %p140
      %s142 = ssub.s32 %s26, %s33
      %p143 = scmp.eq.s32.totalorder %s142, 0
      %s145 = sadd.s32 %s144, 1
      %s146 = scalar_select %p143, %s144, %s145
      %p149 = pneg %p143
      %p150 = scmp.eq.s32.totalorder %s18, 1
      %p151 = por %p149, %p150
      %p152 = scmp.ne.s32.totalorder %s144, %s147
      %p153 = scmp.eq.s32.totalorder %s18, 0
      %p154 = por %p152, %p153
      %p155 = scmp.ne.s32.totalorder %s144, %s147
      %p156 = scmp.eq.s32.totalorder %s23, 1
      %p157 = por %p155, %p156
      %p158 = scmp.ne.s32.totalorder %s147, %s148
      %p159 = scmp.eq.s32.totalorder %s23, 0
      %p160 = por %p158, %p159
      %p161 = scmp.ne.s32.totalorder %s147, %s148
      %p162 = scmp.eq.s32.totalorder %s24, 1
      %p163 = por %p161, %p162
      %p165 = scmp.ne.s32.totalorder %s148, %s164
      %p166 = scmp.eq.s32.totalorder %s24, 0
      %p167 = por %p165, %p166
      %s168 = ssub.s32 %s26, %s33
      %p169 = scmp.eq.s32.totalorder %s168, 0
      %s171 = sadd.s32 %s170, 1
      %s172 = scalar_select %p169, %s170, %s171
      %p175 = pneg %p169
      %p176 = scmp.eq.s32.totalorder %s18, 1
      %p177 = por %p175, %p176
      %p178 = scmp.ne.s32.totalorder %s170, %s173
      %p179 = scmp.eq.s32.totalorder %s18, 0
      %p180 = por %p178, %p179
      %p181 = scmp.ne.s32.totalorder %s170, %s173
      %p182 = scmp.eq.s32.totalorder %s23, 1
      %p183 = por %p181, %p182
      %p184 = scmp.ne.s32.totalorder %s173, %s174
      %p185 = scmp.eq.s32.totalorder %s23, 0
      %p186 = por %p184, %p185
      %p187 = scmp.ne.s32.totalorder %s173, %s174
      %p188 = scmp.eq.s32.totalorder %s24, 1
      %p189 = por %p187, %p188
      %p191 = scmp.ne.s32.totalorder %s174, %s190
      %p192 = scmp.eq.s32.totalorder %s24, 0
      %p193 = por %p191, %p192
      %s194 = ssub.s32 %s26, %s33
      %p195 = scmp.eq.s32.totalorder %s194, 0
      %s197 = sadd.s32 %s196, 1
      %s198 = scalar_select %p195, %s196, %s197
      %p201 = pneg %p195
      %p202 = scmp.eq.s32.totalorder %s18, 1
      %p203 = por %p201, %p202
      %p204 = scmp.ne.s32.totalorder %s196, %s199
      %p205 = scmp.eq.s32.totalorder %s18, 0
      %p206 = por %p204, %p205
      %p207 = scmp.ne.s32.totalorder %s196, %s199
      %p208 = scmp.eq.s32.totalorder %s23, 1
      %p209 = por %p207, %p208
      %p210 = scmp.ne.s32.totalorder %s199, %s200
      %p211 = scmp.eq.s32.totalorder %s23, 0
      %p212 = por %p210, %p211
      %p213 = scmp.ne.s32.totalorder %s199, %s200
      %p214 = scmp.eq.s32.totalorder %s24, 1
      %p215 = por %p213, %p214
      %p217 = scmp.ne.s32.totalorder %s200, %s216
      %p218 = scmp.eq.s32.totalorder %s24, 0
      %p219 = por %p217, %p218
      %s220 = ssub.s32 %s26, %s33
      %p221 = scmp.eq.s32.totalorder %s220, 0
      %s223 = sadd.s32 %s222, 1
      %s224 = scalar_select %p221, %s222, %s223
      %p227 = pneg %p221
      %p228 = scmp.eq.s32.totalorder %s18, 1
      %p229 = por %p227, %p228
      %p230 = scmp.ne.s32.totalorder %s222, %s225
      %p231 = scmp.eq.s32.totalorder %s18, 0
      %p232 = por %p230, %p231
      %p233 = scmp.ne.s32.totalorder %s222, %s225
      %p234 = scmp.eq.s32.totalorder %s23, 1
      %p235 = por %p233, %p234
      %p236 = scmp.ne.s32.totalorder %s225, %s226
      %p237 = scmp.eq.s32.totalorder %s23, 0
      %p238 = por %p236, %p237
      %p239 = scmp.ne.s32.totalorder %s225, %s226
      %p240 = scmp.eq.s32.totalorder %s24, 1
      %p241 = por %p239, %p240
      %p243 = scmp.ne.s32.totalorder %s226, %s242
      %p244 = scmp.eq.s32.totalorder %s24, 0
      %p245 = por %p243, %p244
      %s246 = ssub.s32 %s25, %s37
      %p247 = scmp.eq.s32.totalorder %s246, 0
      %s249 = sadd.s32 %s248, 1
      %s250 = scalar_select %p247, %s248, %s249
      %p253 = pneg %p247
      %p254 = scmp.eq.s32.totalorder %s18, 1
      %p255 = por %p253, %p254
      %p256 = scmp.ne.s32.totalorder %s248, %s251
      %p257 = scmp.eq.s32.totalorder %s18, 0
      %p258 = por %p256, %p257
      %p259 = scmp.ne.s32.totalorder %s248, %s251
      %p260 = scmp.eq.s32.totalorder %s23, 1
      %p261 = por %p259, %p260
      %p262 = scmp.ne.s32.totalorder %s251, %s252
      %p263 = scmp.eq.s32.totalorder %s23, 0
      %p264 = por %p262, %p263
      %p265 = scmp.ne.s32.totalorder %s251, %s252
      %p266 = scmp.eq.s32.totalorder %s24, 1
      %p267 = por %p265, %p266
      %p269 = scmp.ne.s32.totalorder %s252, %s268
      %p270 = scmp.eq.s32.totalorder %s24, 0
      %p271 = por %p269, %p270
      %p272 = scmp.le.s32.totalorder 1, %s18
      %p273 = scmp.lt.s32.totalorder %s18, 3
      %p274 = pnand %p272, %p273
      %p275 = pneg %p274
      // Predicated region
      $region9: #{tpu_custom_call.1} parent=5 // pred_check
        _
      $region10: #{tpu_custom_call.1} parent=5 // pred_check_branch
        %277 = sbr.rel (%p274) target = $region12
      $region11: #{tpu_custom_call.1} parent=5 // pred_region
        %s278 = ssub.s32 %s18, 1
        // Predicated region
        $region13: #{tpu_custom_call.1} parent=11 // pred_check
          %p279 = pneg %p56
        $region14: #{tpu_custom_call.1} parent=11 // pred_check_branch
          %281 = sbr.rel (%p279) target = $region16
        $region15: #{tpu_custom_call.1} parent=11 // pred_region
          %s282 = smul.u32 2, %s27
          %p283 = scmp.lt.s32.totalorder %s282, 1
          %s284 = scalar_select %p283, %s282, 1
          %s285 = smul.addr %s284, 8
          %s286 = scalar_lea.vmem %s0, %s285
          %s287 = smul.u32 2, %s27
        $region16: #{tpu_custom_call.1} parent=11 // pred_fallthru
          _
      $region12: #{tpu_custom_call.1} parent=5 // pred_fallthru
        _
      %p288 = scmp.lt.s32.totalorder %s18, 2
      // Predicated region
      $region17: #{tpu_custom_call.1} parent=5 // pred_check
        %p289 = pneg %p288
      $region18: #{tpu_custom_call.1} parent=5 // pred_check_branch
        %291 = sbr.rel (%p289) target = $region20
      $region19: #{tpu_custom_call.1} parent=5 // pred_region
        // Predicated region
        $region21: #{tpu_custom_call.1} parent=19 // pred_check
          %p292 = pneg %p76
        $region22: #{tpu_custom_call.1} parent=19 // pred_check_branch
          %294 = sbr.rel (%p292) target = $region24
        $region23: #{tpu_custom_call.1} parent=19 // pred_region
          %p295 = scmp.lt.s32.totalorder %s26, 1
          %s296 = scalar_select %p295, %s26, 1
          %s297 = smul.addr %s296, 4
          %s298 = smul.addr %s297, 4
          %s299 = scalar_lea.vmem %s1, %s298
        $region24: #{tpu_custom_call.1} parent=19 // pred_fallthru
          _
        // Predicated region
        $region25: #{tpu_custom_call.1} parent=19 // pred_check
          %p300 = pneg %p102
        $region26: #{tpu_custom_call.1} parent=19 // pred_check_branch
          %302 = sbr.rel (%p300) target = $region28
        $region27: #{tpu_custom_call.1} parent=19 // pred_region
          %p303 = scmp.lt.s32.totalorder %s26, 1
          %s304 = scalar_select %p303, %s26, 1
          %s305 = scalar_lea.vmem %s2, %s304
        $region28: #{tpu_custom_call.1} parent=19 // pred_fallthru
          _
        // Predicated region
        $region29: #{tpu_custom_call.1} parent=19 // pred_check
          %p306 = pneg %p128
        $region30: #{tpu_custom_call.1} parent=19 // pred_check_branch
          %308 = sbr.rel (%p306) target = $region32
        $region31: #{tpu_custom_call.1} parent=19 // pred_region
          %p309 = scmp.lt.s32.totalorder %s26, 1
          %s310 = scalar_select %p309, %s26, 1
          %s311 = smul.addr %s310, 4
          %s312 = smul.addr %s311, 4
          %s313 = scalar_lea.vmem %s3, %s312
        $region32: #{tpu_custom_call.1} parent=19 // pred_fallthru
          _
        // Predicated region
        $region33: #{tpu_custom_call.1} parent=19 // pred_check
          %p314 = pneg %p154
        $region34: #{tpu_custom_call.1} parent=19 // pred_check_branch
          %316 = sbr.rel (%p314) target = $region36
        $region35: #{tpu_custom_call.1} parent=19 // pred_region
          %p317 = scmp.lt.s32.totalorder %s26, 1
          %s318 = scalar_select %p317, %s26, 1
          %s319 = smul.addr %s318, 4
          %s320 = smul.addr %s319, 4
          %s321 = scalar_lea.vmem %s4, %s320
        $region36: #{tpu_custom_call.1} parent=19 // pred_fallthru
          _
        // Predicated region
        $region37: #{tpu_custom_call.1} parent=19 // pred_check
          %p322 = pneg %p180
        $region38: #{tpu_custom_call.1} parent=19 // pred_check_branch
          %324 = sbr.rel (%p322) target = $region40
        $region39: #{tpu_custom_call.1} parent=19 // pred_region
          %s325 = sand.u32 %s170, 1
          %s326 = scalar_lea.sflag [#allocation4], %s325
          %s327 = sand.u32 %s170, 1
          %s328 = scalar_lea.vmem [#allocation3], %s327
          %s330 = ssub.s32 16, 16
          %331 = vsyncadd %s326, %s330
          %s332 = smul.addr %s26, 16
          %s333 = scalar_lea.hbm %s5, %s332
          %s335 = sshll.u32 %s328, 4
          %s336 = int_to_ptr.vmem [resolvable:$true] %s335
          %338 = dma.hbm_to_vmem [thread:$0]  %s333, 16, %s336, %s326
        $region40: #{tpu_custom_call.1} parent=19 // pred_fallthru
          _
        // Predicated region
        $region41: #{tpu_custom_call.1} parent=19 // pred_check
          %p339 = pneg %p206
        $region42: #{tpu_custom_call.1} parent=19 // pred_check_branch
          %341 = sbr.rel (%p339) target = $region44
        $region43: #{tpu_custom_call.1} parent=19 // pred_region
          %p342 = scmp.lt.s32.totalorder %s26, 1
          %s343 = scalar_select %p342, %s26, 1
          %s344 = smul.addr %s343, 8
          %s345 = smul.addr %s344, 4
          %s346 = scalar_lea.vmem %s6, %s345
        $region44: #{tpu_custom_call.1} parent=19 // pred_fallthru
          _
        // Predicated region
        $region45: #{tpu_custom_call.1} parent=19 // pred_check
          %p347 = pneg %p232
        $region46: #{tpu_custom_call.1} parent=19 // pred_check_branch
          %349 = sbr.rel (%p347) target = $region48
        $region47: #{tpu_custom_call.1} parent=19 // pred_region
          %p350 = scmp.lt.s32.totalorder %s26, 1
          %s351 = scalar_select %p350, %s26, 1
          %s352 = smul.addr %s351, 8
          %s353 = scalar_lea.vmem %s7, %s352
        $region48: #{tpu_custom_call.1} parent=19 // pred_fallthru
          _
      $region20: #{tpu_custom_call.1} parent=5 // pred_fallthru
        _
      %p354 = scmp.le.s32.totalorder 1, %s18
      %p355 = scmp.lt.s32.totalorder %s18, 3
      %p356 = pnand %p354, %p355
      %p357 = pneg %p356
      // Predicated region
      $region49: #{tpu_custom_call.1} parent=5 // pred_check
        _
      $region50: #{tpu_custom_call.1} parent=5 // pred_check_branch
        %359 = sbr.rel (%p356) target = $region52
      $region51: #{tpu_custom_call.1} parent=5 // pred_region
        %s360 = ssub.s32 %s18, 1
        %s361 = sand.u32 %s173, 1
        %s362 = scalar_lea.sflag [#allocation4], %s361
        %s363 = sand.u32 %s173, 1
        %s364 = scalar_lea.vmem [#allocation3], %s363
        // Predicated region
        $region53: #{tpu_custom_call.1} parent=51 // pred_check
          %p365 = pneg %p186
        $region54: #{tpu_custom_call.1} parent=51 // pred_check_branch
          %367 = sbr.rel (%p365) target = $region56
        $region55: #{tpu_custom_call.1} parent=51 // pred_region
          %368 = dma.done %s362, 16
        $region56: #{tpu_custom_call.1} parent=51 // pred_fallthru
          _
        %s369 = smul.u32 2, %s27
        %p370 = scmp.lt.s32.totalorder %s369, 1
        %s371 = scalar_select %p370, %s369, 1
        %s372 = smul.addr %s371, 8
        %s373 = scalar_lea.vmem %s0, %s372
        %p374 = pneg %p56
        %p375 = pneg %p53
        %p376 = scmp.lt.s32.totalorder %s28, 1
        %s377 = scalar_select %p376, %s28, 1
        %s378 = smul.addr %s377, 4
        %s379 = smul.addr %s378, 4
        %s380 = scalar_lea.vmem %s1, %s379
        %p381 = pneg %p82
        %p382 = pneg %p79
        %p383 = scmp.lt.s32.totalorder %s28, 1
        %s384 = scalar_select %p383, %s28, 1
        %s385 = scalar_lea.vmem %s2, %s384
        %p386 = pneg %p108
        %p387 = pneg %p105
        %p388 = scmp.lt.s32.totalorder %s28, 1
        %s389 = scalar_select %p388, %s28, 1
        %s390 = smul.addr %s389, 4
        %s391 = smul.addr %s390, 4
        %s392 = scalar_lea.vmem %s3, %s391
        %p393 = pneg %p134
        %p394 = pneg %p131
        %p395 = scmp.lt.s32.totalorder %s28, 1
        %s396 = scalar_select %p395, %s28, 1
        %s397 = smul.addr %s396, 4
        %s398 = smul.addr %s397, 4
        %s399 = scalar_lea.vmem %s4, %s398
        %p400 = pneg %p160
        %p401 = pneg %p157
        %s402 = sand.u32 %s173, 1
        %s403 = scalar_lea.sflag [#allocation4], %s402
        %s404 = sand.u32 %s173, 1
        %s405 = scalar_lea.vmem [#allocation3], %s404
        %p406 = pneg %p186
        %p407 = pneg %p183
        %p408 = scmp.lt.s32.totalorder %s28, 1
        %s409 = scalar_select %p408, %s28, 1
        %s410 = smul.addr %s409, 8
        %s411 = smul.addr %s410, 4
        %s412 = scalar_lea.vmem %s6, %s411
        %p413 = pneg %p212
        %p414 = pneg %p209
        %p415 = scmp.lt.s32.totalorder %s28, 1
        %s416 = scalar_select %p415, %s28, 1
        %s417 = smul.addr %s416, 8
        %s418 = scalar_lea.vmem %s7, %s417
        %p419 = pneg %p238
        %p420 = pneg %p235
        %p421 = pneg %p264
        %p422 = pneg %p261
        %s423 = smul.u32 2, %s27
        %p424 = scmp.lt.s32.totalorder %s423, 1
        %s425 = scalar_select %p424, %s423, 1
        %s426 = smul.addr %s425, 8
        %s427 = scalar_lea.vmem %s0, %s426
        %s428 = smul.u32 2, %s27
        %p429 = scmp.lt.s32.totalorder %s28, 1
        %s430 = scalar_select %p429, %s28, 1
        %s431 = smul.addr %s430, 4
        %s432 = smul.addr %s431, 4
        %s433 = scalar_lea.vmem %s1, %s432
        %p434 = scmp.lt.s32.totalorder %s28, 1
        %s435 = scalar_select %p434, %s28, 1
        %s436 = scalar_lea.vmem %s2, %s435
        %p437 = scmp.lt.s32.totalorder %s28, 1
        %s438 = scalar_select %p437, %s28, 1
        %s439 = smul.addr %s438, 4
        %s440 = smul.addr %s439, 4
        %s441 = scalar_lea.vmem %s3, %s440
        %p442 = scmp.lt.s32.totalorder %s28, 1
        %s443 = scalar_select %p442, %s28, 1
        %s444 = smul.addr %s443, 4
        %s445 = smul.addr %s444, 4
        %s446 = scalar_lea.vmem %s4, %s445
        %p447 = scmp.lt.s32.totalorder %s28, 1
        %s448 = scalar_select %p447, %s28, 1
        %s449 = smul.addr %s448, 8
        %s450 = smul.addr %s449, 4
        %s451 = scalar_lea.vmem %s6, %s450
        %p452 = scmp.lt.s32.totalorder %s28, 1
        %s453 = scalar_select %p452, %s28, 1
        %s454 = smul.addr %s453, 8
        %s455 = scalar_lea.vmem %s7, %s454
        %s456 = smul.u32 2, %s27
        %p458 = scmp.eq.s32.totalorder %s28, 0
        // Predicated region
        $region57: #{tpu_custom_call.1} parent=51 // pred_check
          %p459 = pneg %p458
        $region58: #{tpu_custom_call.1} parent=51 // pred_check_branch
          %461 = sbr.rel (%p459) target = $region60
        $region59: #{tpu_custom_call.1} parent=51 // pred_region
          %v462 = vld [vmem:[%s427] sm:$0xff]
          %v463 = vld [vmem:[%s427 + $0x8] sm:$0xff]
          %vm464 = vcmask 261120
          %465 = vst.msk [vmem:[#allocation2] sm:$0xff] %vm464, %v462
          %466 = vst.msk [vmem:[#allocation2 + $0x8] sm:$0xff] %vm464, %v463
        $region60: #{tpu_custom_call.1} parent=51 // pred_fallthru
          _
        %v467 = vld [vmem:[#allocation2] sm:$0xff]
        %v468 = vld [vmem:[#allocation2 + $0x8] sm:$0xff]
        %v469 = vld [vmem:[%s455] sm:$0x3f]
        %v470 = vpack.c.bf16 %v468, %v467
        %v471 = vld [vmem:[%s433] sm:$0xf]
        %v472 = vld [vmem:[%s433 + $0x4] sm:$0xf]
        %v473 = vld [vmem:[%s433 + $0x8] sm:$0xf]
        %v474 = vld [vmem:[%s433 + $0xc] sm:$0xf]
        %v475 = vld [vmem:[%s436] sm:$0x1]
        %v477 = vlaneseq
        %v478 = vshrl.u32 %v477, 7
        %v479 = vsub.s32 0, %v478
        %v480 = vrot.slane %v475, %v479
        %v486 = vunpack.c.l.b16 %v471
        %v487 = vunpack.c.l.b16 %v472
        %v488 = vunpack.c.l.b16 %v473
        %v489 = vunpack.c.l.b16 %v474
        %v490 = vpack.c.b16 %v487, %v486
        %v491 = vpack.c.b16 %v489, %v488
        %vm494 = vcmask 261120
        %v496 = vsel %vm494, %v470, 0
        %498 = vmatprep.subr.bf16.mxu0 0
        %499 = vmatpush1.bf16.msra.mxu0 %v490
        %500 = vmatprep.subr.bf16.mxu0 0
        %501 = vmatpush1.bf16.msra.mxu0 %v491
        %502 = vmatprep.subr.bf16.mxu0 0
        %503 = vmatpush1.bf16.msra.mxu0 0
        %504 = vmatprep.subr.bf16.mxu0 0
        %505 = vmatpush1.bf16.msra.mxu0 0
        %506 = vmatprep.subr.bf16.mxu0 0
        %507 = vmatpush1.bf16.msra.mxu0 0
        %508 = vmatprep.subr.bf16.mxu0 0
        %509 = vmatpush1.bf16.msra.mxu0 0
        %510 = vmatprep.subr.bf16.mxu0 0
        %511 = vmatpush1.bf16.msra.mxu0 0
        %512 = vmatprep.subr.bf16.mxu0 0
        %513 = vmatpush1.bf16.msra.mxu0 0
        %514 = vmatprep.subr.bf16.mxu0 0
        %515 = vmatpush1.bf16.msra.mxu0 0
        %516 = vmatprep.subr.bf16.mxu0 0
        %517 = vmatpush1.bf16.msra.mxu0 0
        %518 = vmatprep.subr.bf16.mxu0 0
        %519 = vmatpush1.bf16.msra.mxu0 0
        %520 = vmatprep.subr.bf16.mxu0 0
        %521 = vmatpush1.bf16.msra.mxu0 0
        %522 = vmatprep.subr.bf16.mxu0 0
        %523 = vmatpush1.bf16.msra.mxu0 0
        %524 = vmatprep.subr.bf16.mxu0 0
        %525 = vmatpush1.bf16.msra.mxu0 0
        %526 = vmatprep.subr.bf16.mxu0 0
        %527 = vmatpush1.bf16.msra.mxu0 0
        %528 = vmatprep.subr.bf16.mxu0 0
        %529 = vmatpush1.bf16.msra.mxu0 0
        %530 = vmatprep.mubr.bf16.mxu0 0
        %531 = vmatmul.mubr.bf16.gmra.mrb[0].mxu0 %v496
        %v532 = vpop.f32.mrb[0].mxu0
        %v533 = vadd.f32 %v480, %v532
        %v534 = vpop.f32.mrb[0].mxu0
        %v535 = vpop.f32.mrb[0].mxu0
        %v536 = vadd.f32 %v480, %v535
        %v537 = vpop.f32.mrb[0].mxu0
        %538 = vdwg.mxu0
        %v539 = vpack.c.bf16 %v536, %v533
        %v541 = vunpack.c.l.b16 %v539
        %v542 = vunpack.c.h.b16 %v539
        %v543 = vpack.c.b16 %v541, %v541
        %v544 = vpack.c.b16 %v542, %v542
        %545 = vrot.lane.b32.xlu0 %v543, 96
        %v546 = vpop.permute.xlu0 %545
        %vm547 = vcmask 64512
        %v549 = vsel %vm547, %v543, 0
        %v552 = vsel %vm547, %v546, 0
        %554 = vmatprep.subr.bf16.mxu0 0
        %555 = vmatpush1.bf16.xpose.msra.mxu0 %v552
        %556 = vmatprep.subr.bf16.mxu0 0
        %557 = vmatpush1.bf16.xpose.msra.mxu0 0
        %558 = vmatprep.subr.bf16.mxu0 0
        %559 = vmatpush1.bf16.xpose.msra.mxu0 0
        %560 = vmatprep.subr.bf16.mxu0 0
        %561 = vmatpush1.bf16.xpose.msra.mxu0 0
        %562 = vmatprep.subr.bf16.mxu0 0
        %563 = vmatpush1.bf16.xpose.msra.mxu0 0
        %564 = vmatprep.subr.bf16.mxu0 0
        %565 = vmatpush1.bf16.xpose.msra.mxu0 0
        %566 = vmatprep.subr.bf16.mxu0 0
        %567 = vmatpush1.bf16.xpose.msra.mxu0 0
        %568 = vmatprep.subr.bf16.mxu0 0
        %569 = vmatpush1.bf16.xpose.msra.mxu0 0
        %570 = vmatprep.subr.bf16.mxu0 0
        %571 = vmatpush1.bf16.xpose.msra.mxu0 0
        %572 = vmatprep.subr.bf16.mxu0 0
        %573 = vmatpush1.bf16.xpose.msra.mxu0 0
        %574 = vmatprep.subr.bf16.mxu0 0
        %575 = vmatpush1.bf16.xpose.msra.mxu0 0
        %576 = vmatprep.subr.bf16.mxu0 0
        %577 = vmatpush1.bf16.xpose.msra.mxu0 0
        %578 = vmatprep.subr.bf16.mxu0 0
        %579 = vmatpush1.bf16.xpose.msra.mxu0 0
        %580 = vmatprep.subr.bf16.mxu0 0
        %581 = vmatpush1.bf16.xpose.msra.mxu0 0
        %582 = vmatprep.subr.bf16.mxu0 0
        %583 = vmatpush1.bf16.xpose.msra.mxu0 0
        %584 = vmatprep.subr.bf16.mxu0 0
        %585 = vmatpush1.bf16.xpose.msra.mxu0 0
        %586 = vmatprep.mubr.bf16.mxu0 0
        %587 = vmatmul.mubr.bf16.gmra.mrb[0].mxu0 %v549
        %v588 = vpop.f32.mrb[0].mxu0
        %v589 = vadd.f32 0.0, %v588
        %v590 = vpop.f32.mrb[0].mxu0
        %v591 = vpop.f32.mrb[0].mxu0
        %v592 = vpop.f32.mrb[0].mxu0
        %593 = vdwg.mxu0
        %594 = vrot.lane.b32.xlu0 %v544, 96
        %v595 = vpop.permute.xlu0 %594
        %v597 = vsel %vm547, %v544, 0
        %v600 = vsel %vm547, %v595, 0
        %602 = vmatprep.subr.bf16.mxu0 0
        %603 = vmatpush1.bf16.xpose.msra.mxu0 %v600
        %604 = vmatprep.subr.bf16.mxu0 0
        %605 = vmatpush1.bf16.xpose.msra.mxu0 0
        %606 = vmatprep.subr.bf16.mxu0 0
        %607 = vmatpush1.bf16.xpose.msra.mxu0 0
        %608 = vmatprep.subr.bf16.mxu0 0
        %609 = vmatpush1.bf16.xpose.msra.mxu0 0
        %610 = vmatprep.subr.bf16.mxu0 0
        %611 = vmatpush1.bf16.xpose.msra.mxu0 0
        %612 = vmatprep.subr.bf16.mxu0 0
        %613 = vmatpush1.bf16.xpose.msra.mxu0 0
        %614 = vmatprep.subr.bf16.mxu0 0
        %615 = vmatpush1.bf16.xpose.msra.mxu0 0
        %616 = vmatprep.subr.bf16.mxu0 0
        %617 = vmatpush1.bf16.xpose.msra.mxu0 0
        %618 = vmatprep.subr.bf16.mxu0 0
        %619 = vmatpush1.bf16.xpose.msra.mxu0 0
        %620 = vmatprep.subr.bf16.mxu0 0
        %621 = vmatpush1.bf16.xpose.msra.mxu0 0
        %622 = vmatprep.subr.bf16.mxu0 0
        %623 = vmatpush1.bf16.xpose.msra.mxu0 0
        %624 = vmatprep.subr.bf16.mxu0 0
        %625 = vmatpush1.bf16.xpose.msra.mxu0 0
        %626 = vmatprep.subr.bf16.mxu0 0
        %627 = vmatpush1.bf16.xpose.msra.mxu0 0
        %628 = vmatprep.subr.bf16.mxu0 0
        %629 = vmatpush1.bf16.xpose.msra.mxu0 0
        %630 = vmatprep.subr.bf16.mxu0 0
        %631 = vmatpush1.bf16.xpose.msra.mxu0 0
        %632 = vmatprep.subr.bf16.mxu0 0
        %633 = vmatpush1.bf16.xpose.msra.mxu0 0
        %634 = vmatprep.mubr.bf16.mxu0 0
        %635 = vmatmul.mubr.bf16.gmra.mrb[0].mxu0 %v597
        %v636 = vpop.f32.mrb[0].mxu0
        %v637 = vadd.f32 0.0, %v636
        %v638 = vpop.f32.mrb[0].mxu0
        %v639 = vpop.f32.mrb[0].mxu0
        %v640 = vpop.f32.mrb[0].mxu0
        %641 = vdwg.mxu0
        %v642 = vsel %vm547, %v589, -inf
        %643 = vmax.xlane.f32.xlu0 %v642
        %v644 = vpop.xlane.xlu0 %643
        %v645 = vsel %vm547, %v637, -inf
        %646 = vmax.xlane.f32.xlu0 %v645
        %v647 = vpop.xlane.xlu0 %646
        %v648 = vsub.f32 %v589, %v644
        %v649 = vsub.f32 %v637, %v647
        %v650 = vmul.f32 %v648, 1.442695
        %v651 = vpow.pop %v650
        %v652 = vmul.f32 %v649, 1.442695
        %v653 = vpow.pop %v652
        %v654 = vsel %vm547, %v651, 0.0
        %655 = vadd.xlane.f32.xlu0 %v654
        %v656 = vpop.xlane.xlu0 %655
        %v657 = vsel %vm547, %v653, 0.0
        %658 = vadd.xlane.f32.xlu0 %v657
        %v659 = vpop.xlane.xlu0 %658
        %v660 = vrcp.pop %v656
        %v661 = vrcp.pop %v659
        %v662 = vmul.f32 %v651, %v660
        %v663 = vmul.f32 %v653, %v661
        %v664 = vpack.c.bf16 %v662, %v662
        %v665 = vpack.c.bf16 %v663, %v663
        %666 = vrot.lane.b32.xlu0 %v543, 64
        %v667 = vpop.permute.xlu0 %666
        %v669 = vsel %vm547, %v664, 0
        %vm671 = vcmask 1043456
        %v673 = vsel %vm671, %v667, 0
        %675 = vmatprep.subr.bf16.mxu0 0
        %676 = vmatpush1.bf16.msra.mxu0 %v673
        %677 = vmatprep.subr.bf16.mxu0 0
        %678 = vmatpush1.bf16.msra.mxu0 0
        %679 = vmatprep.subr.bf16.mxu0 0
        %680 = vmatpush1.bf16.msra.mxu0 0
        %681 = vmatprep.subr.bf16.mxu0 0
        %682 = vmatpush1.bf16.msra.mxu0 0
        %683 = vmatprep.subr.bf16.mxu0 0
        %684 = vmatpush1.bf16.msra.mxu0 0
        %685 = vmatprep.subr.bf16.mxu0 0
        %686 = vmatpush1.bf16.msra.mxu0 0
        %687 = vmatprep.subr.bf16.mxu0 0
        %688 = vmatpush1.bf16.msra.mxu0 0
        %689 = vmatprep.subr.bf16.mxu0 0
        %690 = vmatpush1.bf16.msra.mxu0 0
        %691 = vmatprep.subr.bf16.mxu0 0
        %692 = vmatpush1.bf16.msra.mxu0 0
        %693 = vmatprep.subr.bf16.mxu0 0
        %694 = vmatpush1.bf16.msra.mxu0 0
        %695 = vmatprep.subr.bf16.mxu0 0
        %696 = vmatpush1.bf16.msra.mxu0 0
        %697 = vmatprep.subr.bf16.mxu0 0
        %698 = vmatpush1.bf16.msra.mxu0 0
        %699 = vmatprep.subr.bf16.mxu0 0
        %700 = vmatpush1.bf16.msra.mxu0 0
        %701 = vmatprep.subr.bf16.mxu0 0
        %702 = vmatpush1.bf16.msra.mxu0 0
        %703 = vmatprep.subr.bf16.mxu0 0
        %704 = vmatpush1.bf16.msra.mxu0 0
        %705 = vmatprep.subr.bf16.mxu0 0
        %706 = vmatpush1.bf16.msra.mxu0 0
        %707 = vmatprep.mubr.bf16.mxu0 0
        %708 = vmatmul.mubr.bf16.gmra.mrb[0].mxu0 %v669
        %v709 = vpop.f32.mrb[0].mxu0
        %v710 = vadd.f32 0.0, %v709
        %v711 = vpop.f32.mrb[0].mxu0
        %v712 = vpop.f32.mrb[0].mxu0
        %v713 = vpop.f32.mrb[0].mxu0
        %714 = vdwg.mxu0
        %715 = vrot.lane.b32.xlu0 %v544, 64
        %v716 = vpop.permute.xlu0 %715
        %v718 = vsel %vm547, %v665, 0
        %v721 = vsel %vm671, %v716, 0
        %723 = vmatprep.subr.bf16.mxu0 0
        %724 = vmatpush1.bf16.msra.mxu0 %v721
        %725 = vmatprep.subr.bf16.mxu0 0
        %726 = vmatpush1.bf16.msra.mxu0 0
        %727 = vmatprep.subr.bf16.mxu0 0
        %728 = vmatpush1.bf16.msra.mxu0 0
        %729 = vmatprep.subr.bf16.mxu0 0
        %730 = vmatpush1.bf16.msra.mxu0 0
        %731 = vmatprep.subr.bf16.mxu0 0
        %732 = vmatpush1.bf16.msra.mxu0 0
        %733 = vmatprep.subr.bf16.mxu0 0
        %734 = vmatpush1.bf16.msra.mxu0 0
        %735 = vmatprep.subr.bf16.mxu0 0
        %736 = vmatpush1.bf16.msra.mxu0 0
        %737 = vmatprep.subr.bf16.mxu0 0
        %738 = vmatpush1.bf16.msra.mxu0 0
        %739 = vmatprep.subr.bf16.mxu0 0
        %740 = vmatpush1.bf16.msra.mxu0 0
        %741 = vmatprep.subr.bf16.mxu0 0
        %742 = vmatpush1.bf16.msra.mxu0 0
        %743 = vmatprep.subr.bf16.mxu0 0
        %744 = vmatpush1.bf16.msra.mxu0 0
        %745 = vmatprep.subr.bf16.mxu0 0
        %746 = vmatpush1.bf16.msra.mxu0 0
        %747 = vmatprep.subr.bf16.mxu0 0
        %748 = vmatpush1.bf16.msra.mxu0 0
        %749 = vmatprep.subr.bf16.mxu0 0
        %750 = vmatpush1.bf16.msra.mxu0 0
        %751 = vmatprep.subr.bf16.mxu0 0
        %752 = vmatpush1.bf16.msra.mxu0 0
        %753 = vmatprep.subr.bf16.mxu0 0
        %754 = vmatpush1.bf16.msra.mxu0 0
        %755 = vmatprep.mubr.bf16.mxu0 0
        %756 = vmatmul.mubr.bf16.gmra.mrb[0].mxu0 %v718
        %v757 = vpop.f32.mrb[0].mxu0
        %v758 = vadd.f32 0.0, %v757
        %v759 = vpop.f32.mrb[0].mxu0
        %v760 = vpop.f32.mrb[0].mxu0
        %v761 = vpop.f32.mrb[0].mxu0
        %762 = vdwg.mxu0
        %v763 = vpack.c.bf16 %v758, %v710
        %764 = vrot.lane.b32.xlu0 %v543, 120
        %v765 = vpop.permute.xlu0 %764
        %766 = vrot.lane.b32.xlu0 %v543, 88
        %v767 = vpop.permute.xlu0 %766
        %v769 = vsel %vm547, %v765, 0
        %v772 = vsel %vm547, %v767, 0
        %774 = vmatprep.subr.bf16.mxu0 0
        %775 = vmatpush1.bf16.xpose.msra.mxu0 %v772
        %776 = vmatprep.subr.bf16.mxu0 0
        %777 = vmatpush1.bf16.xpose.msra.mxu0 0
        %778 = vmatprep.subr.bf16.mxu0 0
        %779 = vmatpush1.bf16.xpose.msra.mxu0 0
        %780 = vmatprep.subr.bf16.mxu0 0
        %781 = vmatpush1.bf16.xpose.msra.mxu0 0
        %782 = vmatprep.subr.bf16.mxu0 0
        %783 = vmatpush1.bf16.xpose.msra.mxu0 0
        %784 = vmatprep.subr.bf16.mxu0 0
        %785 = vmatpush1.bf16.xpose.msra.mxu0 0
        %786 = vmatprep.subr.bf16.mxu0 0
        %787 = vmatpush1.bf16.xpose.msra.mxu0 0
        %788 = vmatprep.subr.bf16.mxu0 0
        %789 = vmatpush1.bf16.xpose.msra.mxu0 0
        %790 = vmatprep.subr.bf16.mxu0 0
        %791 = vmatpush1.bf16.xpose.msra.mxu0 0
        %792 = vmatprep.subr.bf16.mxu0 0
        %793 = vmatpush1.bf16.xpose.msra.mxu0 0
        %794 = vmatprep.subr.bf16.mxu0 0
        %795 = vmatpush1.bf16.xpose.msra.mxu0 0
        %796 = vmatprep.subr.bf16.mxu0 0
        %797 = vmatpush1.bf16.xpose.msra.mxu0 0
        %798 = vmatprep.subr.bf16.mxu0 0
        %799 = vmatpush1.bf16.xpose.msra.mxu0 0
        %800 = vmatprep.subr.bf16.mxu0 0
        %801 = vmatpush1.bf16.xpose.msra.mxu0 0
        %802 = vmatprep.subr.bf16.mxu0 0
        %803 = vmatpush1.bf16.xpose.msra.mxu0 0
        %804 = vmatprep.subr.bf16.mxu0 0
        %805 = vmatpush1.bf16.xpose.msra.mxu0 0
        %806 = vmatprep.mubr.bf16.mxu0 0
        %807 = vmatmul.mubr.bf16.gmra.mrb[0].mxu0 %v769
        %v808 = vpop.f32.mrb[0].mxu0
        %v809 = vadd.f32 0.0, %v808
        %v810 = vpop.f32.mrb[0].mxu0
        %v811 = vpop.f32.mrb[0].mxu0
        %v812 = vpop.f32.mrb[0].mxu0
        %813 = vdwg.mxu0
        %814 = vrot.lane.b32.xlu0 %v544, 120
        %v815 = vpop.permute.xlu0 %814
        %816 = vrot.lane.b32.xlu0 %v544, 88
        %v817 = vpop.permute.xlu0 %816
        %v819 = vsel %vm547, %v815, 0
        %v822 = vsel %vm547, %v817, 0
        %824 = vmatprep.subr.bf16.mxu0 0
        %825 = vmatpush1.bf16.xpose.msra.mxu0 %v822
        %826 = vmatprep.subr.bf16.mxu0 0
        %827 = vmatpush1.bf16.xpose.msra.mxu0 0
        %828 = vmatprep.subr.bf16.mxu0 0
        %829 = vmatpush1.bf16.xpose.msra.mxu0 0
        %830 = vmatprep.subr.bf16.mxu0 0
        %831 = vmatpush1.bf16.xpose.msra.mxu0 0
        %832 = vmatprep.subr.bf16.mxu0 0
        %833 = vmatpush1.bf16.xpose.msra.mxu0 0
        %834 = vmatprep.subr.bf16.mxu0 0
        %835 = vmatpush1.bf16.xpose.msra.mxu0 0
        %836 = vmatprep.subr.bf16.mxu0 0
        %837 = vmatpush1.bf16.xpose.msra.mxu0 0
        %838 = vmatprep.subr.bf16.mxu0 0
        %839 = vmatpush1.bf16.xpose.msra.mxu0 0
        %840 = vmatprep.subr.bf16.mxu0 0
        %841 = vmatpush1.bf16.xpose.msra.mxu0 0
        %842 = vmatprep.subr.bf16.mxu0 0
        %843 = vmatpush1.bf16.xpose.msra.mxu0 0
        %844 = vmatprep.subr.bf16.mxu0 0
        %845 = vmatpush1.bf16.xpose.msra.mxu0 0
        %846 = vmatprep.subr.bf16.mxu0 0
        %847 = vmatpush1.bf16.xpose.msra.mxu0 0
        %848 = vmatprep.subr.bf16.mxu0 0
        %849 = vmatpush1.bf16.xpose.msra.mxu0 0
        %850 = vmatprep.subr.bf16.mxu0 0
        %851 = vmatpush1.bf16.xpose.msra.mxu0 0
        %852 = vmatprep.subr.bf16.mxu0 0
        %853 = vmatpush1.bf16.xpose.msra.mxu0 0
        %854 = vmatprep.subr.bf16.mxu0 0
        %855 = vmatpush1.bf16.xpose.msra.mxu0 0
        %856 = vmatprep.mubr.bf16.mxu0 0
        %857 = vmatmul.mubr.bf16.gmra.mrb[0].mxu0 %v819
        %v858 = vpop.f32.mrb[0].mxu0
        %v859 = vadd.f32 0.0, %v858
        %v860 = vpop.f32.mrb[0].mxu0
        %v861 = vpop.f32.mrb[0].mxu0
        %v862 = vpop.f32.mrb[0].mxu0
        %863 = vdwg.mxu0
        %v864 = vsel %vm547, %v809, -inf
        %865 = vmax.xlane.f32.xlu0 %v864
        %v866 = vpop.xlane.xlu0 %865
        %v867 = vsel %vm547, %v859, -inf
        %868 = vmax.xlane.f32.xlu0 %v867
        %v869 = vpop.xlane.xlu0 %868
        %v870 = vsub.f32 %v809, %v866
        %v871 = vsub.f32 %v859, %v869
        %v872 = vmul.f32 %v870, 1.442695
        %v873 = vpow.pop %v872
        %v874 = vmul.f32 %v871, 1.442695
        %v875 = vpow.pop %v874
        %v876 = vsel %vm547, %v873, 0.0
        %877 = vadd.xlane.f32.xlu0 %v876
        %v878 = vpop.xlane.xlu0 %877
        %v879 = vsel %vm547, %v875, 0.0
        %880 = vadd.xlane.f32.xlu0 %v879
        %v881 = vpop.xlane.xlu0 %880
        %v882 = vrcp.pop %v878
        %v883 = vrcp.pop %v881
        %v884 = vmul.f32 %v873, %v882
        %v885 = vmul.f32 %v875, %v883
        %v886 = vpack.c.bf16 %v884, %v884
        %v887 = vpack.c.bf16 %v885, %v885
        %888 = vrot.lane.b32.xlu0 %v543, 56
        %v889 = vpop.permute.xlu0 %888
        %v891 = vsel %vm547, %v886, 0
        %v894 = vsel %vm671, %v889, 0
        %896 = vmatprep.subr.bf16.mxu0 0
        %897 = vmatpush1.bf16.msra.mxu0 %v894
        %898 = vmatprep.subr.bf16.mxu0 0
        %899 = vmatpush1.bf16.msra.mxu0 0
        %900 = vmatprep.subr.bf16.mxu0 0
        %901 = vmatpush1.bf16.msra.mxu0 0
        %902 = vmatprep.subr.bf16.mxu0 0
        %903 = vmatpush1.bf16.msra.mxu0 0
        %904 = vmatprep.subr.bf16.mxu0 0
        %905 = vmatpush1.bf16.msra.mxu0 0
        %906 = vmatprep.subr.bf16.mxu0 0
        %907 = vmatpush1.bf16.msra.mxu0 0
        %908 = vmatprep.subr.bf16.mxu0 0
        %909 = vmatpush1.bf16.msra.mxu0 0
        %910 = vmatprep.subr.bf16.mxu0 0
        %911 = vmatpush1.bf16.msra.mxu0 0
        %912 = vmatprep.subr.bf16.mxu0 0
        %913 = vmatpush1.bf16.msra.mxu0 0
        %914 = vmatprep.subr.bf16.mxu0 0
        %915 = vmatpush1.bf16.msra.mxu0 0
        %916 = vmatprep.subr.bf16.mxu0 0
        %917 = vmatpush1.bf16.msra.mxu0 0
        %918 = vmatprep.subr.bf16.mxu0 0
        %919 = vmatpush1.bf16.msra.mxu0 0
        %920 = vmatprep.subr.bf16.mxu0 0
        %921 = vmatpush1.bf16.msra.mxu0 0
        %922 = vmatprep.subr.bf16.mxu0 0
        %923 = vmatpush1.bf16.msra.mxu0 0
        %924 = vmatprep.subr.bf16.mxu0 0
        %925 = vmatpush1.bf16.msra.mxu0 0
        %926 = vmatprep.subr.bf16.mxu0 0
        %927 = vmatpush1.bf16.msra.mxu0 0
        %928 = vmatprep.mubr.bf16.mxu0 0
        %929 = vmatmul.mubr.bf16.gmra.mrb[0].mxu0 %v891
        %v930 = vpop.f32.mrb[0].mxu0
        %v931 = vadd.f32 0.0, %v930
        %v932 = vpop.f32.mrb[0].mxu0
        %v933 = vpop.f32.mrb[0].mxu0
        %v934 = vpop.f32.mrb[0].mxu0
        %935 = vdwg.mxu0
        %936 = vrot.lane.b32.xlu0 %v544, 56
        %v937 = vpop.permute.xlu0 %936
        %v939 = vsel %vm547, %v887, 0
        %v942 = vsel %vm671, %v937, 0
        %944 = vmatprep.subr.bf16.mxu0 0
        %945 = vmatpush1.bf16.msra.mxu0 %v942
        %946 = vmatprep.subr.bf16.mxu0 0
        %947 = vmatpush1.bf16.msra.mxu0 0
        %948 = vmatprep.subr.bf16.mxu0 0
        %949 = vmatpush1.bf16.msra.mxu0 0
        %950 = vmatprep.subr.bf16.mxu0 0
        %951 = vmatpush1.bf16.msra.mxu0 0
        %952 = vmatprep.subr.bf16.mxu0 0
        %953 = vmatpush1.bf16.msra.mxu0 0
        %954 = vmatprep.subr.bf16.mxu0 0
        %955 = vmatpush1.bf16.msra.mxu0 0
        %956 = vmatprep.subr.bf16.mxu0 0
        %957 = vmatpush1.bf16.msra.mxu0 0
        %958 = vmatprep.subr.bf16.mxu0 0
        %959 = vmatpush1.bf16.msra.mxu0 0
        %960 = vmatprep.subr.bf16.mxu0 0
        %961 = vmatpush1.bf16.msra.mxu0 0
        %962 = vmatprep.subr.bf16.mxu0 0
        %963 = vmatpush1.bf16.msra.mxu0 0
        %964 = vmatprep.subr.bf16.mxu0 0
        %965 = vmatpush1.bf16.msra.mxu0 0
        %966 = vmatprep.subr.bf16.mxu0 0
        %967 = vmatpush1.bf16.msra.mxu0 0
        %968 = vmatprep.subr.bf16.mxu0 0
        %969 = vmatpush1.bf16.msra.mxu0 0
        %970 = vmatprep.subr.bf16.mxu0 0
        %971 = vmatpush1.bf16.msra.mxu0 0
        %972 = vmatprep.subr.bf16.mxu0 0
        %973 = vmatpush1.bf16.msra.mxu0 0
        %974 = vmatprep.subr.bf16.mxu0 0
        %975 = vmatpush1.bf16.msra.mxu0 0
        %976 = vmatprep.mubr.bf16.mxu0 0
        %977 = vmatmul.mubr.bf16.gmra.mrb[0].mxu0 %v939
        %v978 = vpop.f32.mrb[0].mxu0
        %v979 = vadd.f32 0.0, %v978
        %v980 = vpop.f32.mrb[0].mxu0
        %v981 = vpop.f32.mrb[0].mxu0
        %v982 = vpop.f32.mrb[0].mxu0
        %983 = vdwg.mxu0
        %v984 = vpack.c.bf16 %v979, %v931
        %985 = vrot.lane.b32.xlu0 %v543, 112
        %v986 = vpop.permute.xlu0 %985
        %987 = vrot.lane.b32.xlu0 %v543, 80
        %v988 = vpop.permute.xlu0 %987
        %v990 = vsel %vm547, %v986, 0
        %v993 = vsel %vm547, %v988, 0
        %995 = vmatprep.subr.bf16.mxu0 0
        %996 = vmatpush1.bf16.xpose.msra.mxu0 %v993
        %997 = vmatprep.subr.bf16.mxu0 0
        %998 = vmatpush1.bf16.xpose.msra.mxu0 0
        %999 = vmatprep.subr.bf16.mxu0 0
        %1000 = vmatpush1.bf16.xpose.msra.mxu0 0
        %1001 = vmatprep.subr.bf16.mxu0 0
        %1002 = vmatpush1.bf16.xpose.msra.mxu0 0
        %1003 = vmatprep.subr.bf16.mxu0 0
        %1004 = vmatpush1.bf16.xpose.msra.mxu0 0
        %1005 = vmatprep.subr.bf16.mxu0 0
        %1006 = vmatpush1.bf16.xpose.msra.mxu0 0
        %1007 = vmatprep.subr.bf16.mxu0 0
        %1008 = vmatpush1.bf16.xpose.msra.mxu0 0
        %1009 = vmatprep.subr.bf16.mxu0 0
        %1010 = vmatpush1.bf16.xpose.msra.mxu0 0
        %1011 = vmatprep.subr.bf16.mxu0 0
        %1012 = vmatpush1.bf16.xpose.msra.mxu0 0
        %1013 = vmatprep.subr.bf16.mxu0 0
        %1014 = vmatpush1.bf16.xpose.msra.mxu0 0
        %1015 = vmatprep.subr.bf16.mxu0 0
        %1016 = vmatpush1.bf16.xpose.msra.mxu0 0
        %1017 = vmatprep.subr.bf16.mxu0 0
        %1018 = vmatpush1.bf16.xpose.msra.mxu0 0
        %1019 = vmatprep.subr.bf16.mxu0 0
        %1020 = vmatpush1.bf16.xpose.msra.mxu0 0
        %1021 = vmatprep.subr.bf16.mxu0 0
        %1022 = vmatpush1.bf16.xpose.msra.mxu0 0
        %1023 = vmatprep.subr.bf16.mxu0 0
        %1024 = vmatpush1.bf16.xpose.msra.mxu0 0
        %1025 = vmatprep.subr.bf16.mxu0 0
        %1026 = vmatpush1.bf16.xpose.msra.mxu0 0
        %1027 = vmatprep.mubr.bf16.mxu0 0
        %1028 = vmatmul.mubr.bf16.gmra.mrb[0].mxu0 %v990
        %v1029 = vpop.f32.mrb[0].mxu0
        %v1030 = vadd.f32 0.0, %v1029
        %v1031 = vpop.f32.mrb[0].mxu0
        %v1032 = vpop.f32.mrb[0].mxu0
        %v1033 = vpop.f32.mrb[0].mxu0
        %1034 = vdwg.mxu0
        %1035 = vrot.lane.b32.xlu0 %v544, 112
        %v1036 = vpop.permute.xlu0 %1035
        %1037 = vrot.lane.b32.xlu0 %v544, 80
        %v1038 = vpop.permute.xlu0 %1037
        %v1040 = vsel %vm547, %v1036, 0
        %v1043 = vsel %vm547, %v1038, 0
        %1045 = vmatprep.subr.bf16.mxu0 0
        %1046 = vmatpush1.bf16.xpose.msra.mxu0 %v1043
        %1047 = vmatprep.subr.bf16.mxu0 0
        %1048 = vmatpush1.bf16.xpose.msra.mxu0 0
        %1049 = vmatprep.subr.bf16.mxu0 0
        %1050 = vmatpush1.bf16.xpose.msra.mxu0 0
        %1051 = vmatprep.subr.bf16.mxu0 0
        %1052 = vmatpush1.bf16.xpose.msra.mxu0 0
        %1053 = vmatprep.subr.bf16.mxu0 0
        %1054 = vmatpush1.bf16.xpose.msra.mxu0 0
        %1055 = vmatprep.subr.bf16.mxu0 0
        %1056 = vmatpush1.bf16.xpose.msra.mxu0 0
        %1057 = vmatprep.subr.bf16.mxu0 0
        %1058 = vmatpush1.bf16.xpose.msra.mxu0 0
        %1059 = vmatprep.subr.bf16.mxu0 0
        %1060 = vmatpush1.bf16.xpose.msra.mxu0 0
        %1061 = vmatprep.subr.bf16.mxu0 0
        %1062 = vmatpush1.bf16.xpose.msra.mxu0 0
        %1063 = vmatprep.subr.bf16.mxu0 0
        %1064 = vmatpush1.bf16.xpose.msra.mxu0 0
        %1065 = vmatprep.subr.bf16.mxu0 0
        %1066 = vmatpush1.bf16.xpose.msra.mxu0 0
        %1067 = vmatprep.subr.bf16.mxu0 0
        %1068 = vmatpush1.bf16.xpose.msra.mxu0 0
        %1069 = vmatprep.subr.bf16.mxu0 0
        %1070 = vmatpush1.bf16.xpose.msra.mxu0 0
        %1071 = vmatprep.subr.bf16.mxu0 0
        %1072 = vmatpush1.bf16.xpose.msra.mxu0 0
        %1073 = vmatprep.subr.bf16.mxu0 0
        %1074 = vmatpush1.bf16.xpose.msra.mxu0 0
        %1075 = vmatprep.subr.bf16.mxu0 0
        %1076 = vmatpush1.bf16.xpose.msra.mxu0 0
        %1077 = vmatprep.mubr.bf16.mxu0 0
        %1078 = vmatmul.mubr.bf16.gmra.mrb[0].mxu0 %v1040
        %v1079 = vpop.f32.mrb[0].mxu0
        %v1080 = vadd.f32 0.0, %v1079
        %v1081 = vpop.f32.mrb[0].mxu0
        %v1082 = vpop.f32.mrb[0].mxu0
        %v1083 = vpop.f32.mrb[0].mxu0
        %1084 = vdwg.mxu0
        %v1085 = vsel %vm547, %v1030, -inf
        %1086 = vmax.xlane.f32.xlu0 %v1085
        %v1087 = vpop.xlane.xlu0 %1086
        %v1088 = vsel %vm547, %v1080, -inf
        %1089 = vmax.xlane.f32.xlu0 %v1088
        %v1090 = vpop.xlane.xlu0 %1089
        %v1091 = vsub.f32 %v1030, %v1087
        %v1092 = vsub.f32 %v1080, %v1090
        %v1093 = vmul.f32 %v1091, 1.442695
        %v1094 = vpow.pop %v1093
        %v1095 = vmul.f32 %v1092, 1.442695
        %v1096 = vpow.pop %v1095
        %v1097 = vsel %vm547, %v1094, 0.0
        %1098 = vadd.xlane.f32.xlu0 %v1097
        %v1099 = vpop.xlane.xlu0 %1098
        %v1100 = vsel %vm547, %v1096, 0.0
        %1101 = vadd.xlane.f32.xlu0 %v1100
        %v1102 = vpop.xlane.xlu0 %1101
        %v1103 = vrcp.pop %v1099
        %v1104 = vrcp.pop %v1102
        %v1105 = vmul.f32 %v1094, %v1103
        %v1106 = vmul.f32 %v1096, %v1104
        %v1107 = vpack.c.bf16 %v1105, %v1105
        %v1108 = vpack.c.bf16 %v1106, %v1106
        %1109 = vrot.lane.b32.xlu0 %v543, 48
        %v1110 = vpop.permute.xlu0 %1109
        %v1112 = vsel %vm547, %v1107, 0
        %v1115 = vsel %vm671, %v1110, 0
        %1117 = vmatprep.subr.bf16.mxu0 0
        %1118 = vmatpush1.bf16.msra.mxu0 %v1115
        %1119 = vmatprep.subr.bf16.mxu0 0
        %1120 = vmatpush1.bf16.msra.mxu0 0
        %1121 = vmatprep.subr.bf16.mxu0 0
        %1122 = vmatpush1.bf16.msra.mxu0 0
        %1123 = vmatprep.subr.bf16.mxu0 0
        %1124 = vmatpush1.bf16.msra.mxu0 0
        %1125 = vmatprep.subr.bf16.mxu0 0
        %1126 = vmatpush1.bf16.msra.mxu0 0
        %1127 = vmatprep.subr.bf16.mxu0 0
        %1128 = vmatpush1.bf16.msra.mxu0 0
        %1129 = vmatprep.subr.bf16.mxu0 0
        %1130 = vmatpush1.bf16.msra.mxu0 0
        %1131 = vmatprep.subr.bf16.mxu0 0
        %1132 = vmatpush1.bf16.msra.mxu0 0
        %1133 = vmatprep.subr.bf16.mxu0 0
        %1134 = vmatpush1.bf16.msra.mxu0 0
        %1135 = vmatprep.subr.bf16.mxu0 0
        %1136 = vmatpush1.bf16.msra.mxu0 0
        %1137 = vmatprep.subr.bf16.mxu0 0
        %1138 = vmatpush1.bf16.msra.mxu0 0
        %1139 = vmatprep.subr.bf16.mxu0 0
        %1140 = vmatpush1.bf16.msra.mxu0 0
        %1141 = vmatprep.subr.bf16.mxu0 0
        %1142 = vmatpush1.bf16.msra.mxu0 0
        %1143 = vmatprep.subr.bf16.mxu0 0
        %1144 = vmatpush1.bf16.msra.mxu0 0
        %1145 = vmatprep.subr.bf16.mxu0 0
        %1146 = vmatpush1.bf16.msra.mxu0 0
        %1147 = vmatprep.subr.bf16.mxu0 0
        %1148 = vmatpush1.bf16.msra.mxu0 0
        %1149 = vmatprep.mubr.bf16.mxu0 0
        %1150 = vmatmul.mubr.bf16.gmra.mrb[0].mxu0 %v1112
        %v1151 = vpop.f32.mrb[0].mxu0
        %v1152 = vadd.f32 0.0, %v1151
        %v1153 = vpop.f32.mrb[0].mxu0
        %v1154 = vpop.f32.mrb[0].mxu0
        %v1155 = vpop.f32.mrb[0].mxu0
        %1156 = vdwg.mxu0
        %1157 = vrot.lane.b32.xlu0 %v544, 48
        %v1158 = vpop.permute.xlu0 %1157
        %v1160 = vsel %vm547, %v1108, 0
        %v1163 = vsel %vm671, %v1158, 0
        %1165 = vmatprep.subr.bf16.mxu0 0
        %1166 = vmatpush1.bf16.msra.mxu0 %v1163
        %1167 = vmatprep.subr.bf16.mxu0 0
        %1168 = vmatpush1.bf16.msra.mxu0 0
        %1169 = vmatprep.subr.bf16.mxu0 0
        %1170 = vmatpush1.bf16.msra.mxu0 0
        %1171 = vmatprep.subr.bf16.mxu0 0
        %1172 = vmatpush1.bf16.msra.mxu0 0
        %1173 = vmatprep.subr.bf16.mxu0 0
        %1174 = vmatpush1.bf16.msra.mxu0 0
        %1175 = vmatprep.subr.bf16.mxu0 0
        %1176 = vmatpush1.bf16.msra.mxu0 0
        %1177 = vmatprep.subr.bf16.mxu0 0
        %1178 = vmatpush1.bf16.msra.mxu0 0
        %1179 = vmatprep.subr.bf16.mxu0 0
        %1180 = vmatpush1.bf16.msra.mxu0 0
        %1181 = vmatprep.subr.bf16.mxu0 0
        %1182 = vmatpush1.bf16.msra.mxu0 0
        %1183 = vmatprep.subr.bf16.mxu0 0
        %1184 = vmatpush1.bf16.msra.mxu0 0
        %1185 = vmatprep.subr.bf16.mxu0 0
        %1186 = vmatpush1.bf16.msra.mxu0 0
        %1187 = vmatprep.subr.bf16.mxu0 0
        %1188 = vmatpush1.bf16.msra.mxu0 0
        %1189 = vmatprep.subr.bf16.mxu0 0
        %1190 = vmatpush1.bf16.msra.mxu0 0
        %1191 = vmatprep.subr.bf16.mxu0 0
        %1192 = vmatpush1.bf16.msra.mxu0 0
        %1193 = vmatprep.subr.bf16.mxu0 0
        %1194 = vmatpush1.bf16.msra.mxu0 0
        %1195 = vmatprep.subr.bf16.mxu0 0
        %1196 = vmatpush1.bf16.msra.mxu0 0
        %1197 = vmatprep.mubr.bf16.mxu0 0
        %1198 = vmatmul.mubr.bf16.gmra.mrb[0].mxu0 %v1160
        %v1199 = vpop.f32.mrb[0].mxu0
        %v1200 = vadd.f32 0.0, %v1199
        %v1201 = vpop.f32.mrb[0].mxu0
        %v1202 = vpop.f32.mrb[0].mxu0
        %v1203 = vpop.f32.mrb[0].mxu0
        %1204 = vdwg.mxu0
        %v1205 = vpack.c.bf16 %v1200, %v1152
        %1206 = vrot.lane.b32.xlu0 %v543, 104
        %v1207 = vpop.permute.xlu0 %1206
        %1208 = vrot.lane.b32.xlu0 %v543, 72
        %v1209 = vpop.permute.xlu0 %1208
        %v1211 = vsel %vm547, %v1207, 0
        %v1214 = vsel %vm547, %v1209, 0
        %1216 = vmatprep.subr.bf16.mxu0 0
        %1217 = vmatpush1.bf16.xpose.msra.mxu0 %v1214
        %1218 = vmatprep.subr.bf16.mxu0 0
        %1219 = vmatpush1.bf16.xpose.msra.mxu0 0
        %1220 = vmatprep.subr.bf16.mxu0 0
        %1221 = vmatpush1.bf16.xpose.msra.mxu0 0
        %1222 = vmatprep.subr.bf16.mxu0 0
        %1223 = vmatpush1.bf16.xpose.msra.mxu0 0
        %1224 = vmatprep.subr.bf16.mxu0 0
        %1225 = vmatpush1.bf16.xpose.msra.mxu0 0
        %1226 = vmatprep.subr.bf16.mxu0 0
        %1227 = vmatpush1.bf16.xpose.msra.mxu0 0
        %1228 = vmatprep.subr.bf16.mxu0 0
        %1229 = vmatpush1.bf16.xpose.msra.mxu0 0
        %1230 = vmatprep.subr.bf16.mxu0 0
        %1231 = vmatpush1.bf16.xpose.msra.mxu0 0
        %1232 = vmatprep.subr.bf16.mxu0 0
        %1233 = vmatpush1.bf16.xpose.msra.mxu0 0
        %1234 = vmatprep.subr.bf16.mxu0 0
        %1235 = vmatpush1.bf16.xpose.msra.mxu0 0
        %1236 = vmatprep.subr.bf16.mxu0 0
        %1237 = vmatpush1.bf16.xpose.msra.mxu0 0
        %1238 = vmatprep.subr.bf16.mxu0 0
        %1239 = vmatpush1.bf16.xpose.msra.mxu0 0
        %1240 = vmatprep.subr.bf16.mxu0 0
        %1241 = vmatpush1.bf16.xpose.msra.mxu0 0
        %1242 = vmatprep.subr.bf16.mxu0 0
        %1243 = vmatpush1.bf16.xpose.msra.mxu0 0
        %1244 = vmatprep.subr.bf16.mxu0 0
        %1245 = vmatpush1.bf16.xpose.msra.mxu0 0
        %1246 = vmatprep.subr.bf16.mxu0 0
        %1247 = vmatpush1.bf16.xpose.msra.mxu0 0
        %1248 = vmatprep.mubr.bf16.mxu0 0
        %1249 = vmatmul.mubr.bf16.gmra.mrb[0].mxu0 %v1211
        %v1250 = vpop.f32.mrb[0].mxu0
        %v1251 = vadd.f32 0.0, %v1250
        %v1252 = vpop.f32.mrb[0].mxu0
        %v1253 = vpop.f32.mrb[0].mxu0
        %v1254 = vpop.f32.mrb[0].mxu0
        %1255 = vdwg.mxu0
        %1256 = vrot.lane.b32.xlu0 %v544, 104
        %v1257 = vpop.permute.xlu0 %1256
        %1258 = vrot.lane.b32.xlu0 %v544, 72
        %v1259 = vpop.permute.xlu0 %1258
        %v1261 = vsel %vm547, %v1257, 0
        %v1264 = vsel %vm547, %v1259, 0
        %1266 = vmatprep.subr.bf16.mxu0 0
        %1267 = vmatpush1.bf16.xpose.msra.mxu0 %v1264
        %1268 = vmatprep.subr.bf16.mxu0 0
        %1269 = vmatpush1.bf16.xpose.msra.mxu0 0
        %1270 = vmatprep.subr.bf16.mxu0 0
        %1271 = vmatpush1.bf16.xpose.msra.mxu0 0
        %1272 = vmatprep.subr.bf16.mxu0 0
        %1273 = vmatpush1.bf16.xpose.msra.mxu0 0
        %1274 = vmatprep.subr.bf16.mxu0 0
        %1275 = vmatpush1.bf16.xpose.msra.mxu0 0
        %1276 = vmatprep.subr.bf16.mxu0 0
        %1277 = vmatpush1.bf16.xpose.msra.mxu0 0
        %1278 = vmatprep.subr.bf16.mxu0 0
        %1279 = vmatpush1.bf16.xpose.msra.mxu0 0
        %1280 = vmatprep.subr.bf16.mxu0 0
        %1281 = vmatpush1.bf16.xpose.msra.mxu0 0
        %1282 = vmatprep.subr.bf16.mxu0 0
        %1283 = vmatpush1.bf16.xpose.msra.mxu0 0
        %1284 = vmatprep.subr.bf16.mxu0 0
        %1285 = vmatpush1.bf16.xpose.msra.mxu0 0
        %1286 = vmatprep.subr.bf16.mxu0 0
        %1287 = vmatpush1.bf16.xpose.msra.mxu0 0
        %1288 = vmatprep.subr.bf16.mxu0 0
        %1289 = vmatpush1.bf16.xpose.msra.mxu0 0
        %1290 = vmatprep.subr.bf16.mxu0 0
        %1291 = vmatpush1.bf16.xpose.msra.mxu0 0
        %1292 = vmatprep.subr.bf16.mxu0 0
        %1293 = vmatpush1.bf16.xpose.msra.mxu0 0
        %1294 = vmatprep.subr.bf16.mxu0 0
        %1295 = vmatpush1.bf16.xpose.msra.mxu0 0
        %1296 = vmatprep.subr.bf16.mxu0 0
        %1297 = vmatpush1.bf16.xpose.msra.mxu0 0
        %1298 = vmatprep.mubr.bf16.mxu0 0
        %1299 = vmatmul.mubr.bf16.gmra.mrb[0].mxu0 %v1261
        %v1300 = vpop.f32.mrb[0].mxu0
        %v1301 = vadd.f32 0.0, %v1300
        %v1302 = vpop.f32.mrb[0].mxu0
        %v1303 = vpop.f32.mrb[0].mxu0
        %v1304 = vpop.f32.mrb[0].mxu0
        %1305 = vdwg.mxu0
        %v1306 = vsel %vm547, %v1251, -inf
        %1307 = vmax.xlane.f32.xlu0 %v1306
        %v1308 = vpop.xlane.xlu0 %1307
        %v1309 = vsel %vm547, %v1301, -inf
        %1310 = vmax.xlane.f32.xlu0 %v1309
        %v1311 = vpop.xlane.xlu0 %1310
        %v1312 = vsub.f32 %v1251, %v1308
        %v1313 = vsub.f32 %v1301, %v1311
        %v1314 = vmul.f32 %v1312, 1.442695
        %v1315 = vpow.pop %v1314
        %v1316 = vmul.f32 %v1313, 1.442695
        %v1317 = vpow.pop %v1316
        %v1318 = vsel %vm547, %v1315, 0.0
        %1319 = vadd.xlane.f32.xlu0 %v1318
        %v1320 = vpop.xlane.xlu0 %1319
        %v1321 = vsel %vm547, %v1317, 0.0
        %1322 = vadd.xlane.f32.xlu0 %v1321
        %v1323 = vpop.xlane.xlu0 %1322
        %v1324 = vrcp.pop %v1320
        %v1325 = vrcp.pop %v1323
        %v1326 = vmul.f32 %v1315, %v1324
        %v1327 = vmul.f32 %v1317, %v1325
        %v1328 = vpack.c.bf16 %v1326, %v1326
        %v1329 = vpack.c.bf16 %v1327, %v1327
        %1330 = vrot.lane.b32.xlu0 %v543, 40
        %v1331 = vpop.permute.xlu0 %1330
        %v1333 = vsel %vm547, %v1328, 0
        %v1336 = vsel %vm671, %v1331, 0
        %1338 = vmatprep.subr.bf16.mxu0 0
        %1339 = vmatpush1.bf16.msra.mxu0 %v1336
        %1340 = vmatprep.subr.bf16.mxu0 0
        %1341 = vmatpush1.bf16.msra.mxu0 0
        %1342 = vmatprep.subr.bf16.mxu0 0
        %1343 = vmatpush1.bf16.msra.mxu0 0
        %1344 = vmatprep.subr.bf16.mxu0 0
        %1345 = vmatpush1.bf16.msra.mxu0 0
        %1346 = vmatprep.subr.bf16.mxu0 0
        %1347 = vmatpush1.bf16.msra.mxu0 0
        %1348 = vmatprep.subr.bf16.mxu0 0
        %1349 = vmatpush1.bf16.msra.mxu0 0
        %1350 = vmatprep.subr.bf16.mxu0 0
        %1351 = vmatpush1.bf16.msra.mxu0 0
        %1352 = vmatprep.subr.bf16.mxu0 0
        %1353 = vmatpush1.bf16.msra.mxu0 0
        %1354 = vmatprep.subr.bf16.mxu0 0
        %1355 = vmatpush1.bf16.msra.mxu0 0
        %1356 = vmatprep.subr.bf16.mxu0 0
        %1357 = vmatpush1.bf16.msra.mxu0 0
        %1358 = vmatprep.subr.bf16.mxu0 0
        %1359 = vmatpush1.bf16.msra.mxu0 0
        %1360 = vmatprep.subr.bf16.mxu0 0
        %1361 = vmatpush1.bf16.msra.mxu0 0
        %1362 = vmatprep.subr.bf16.mxu0 0
        %1363 = vmatpush1.bf16.msra.mxu0 0
        %1364 = vmatprep.subr.bf16.mxu0 0
        %1365 = vmatpush1.bf16.msra.mxu0 0
        %1366 = vmatprep.subr.bf16.mxu0 0
        %1367 = vmatpush1.bf16.msra.mxu0 0
        %1368 = vmatprep.subr.bf16.mxu0 0
        %1369 = vmatpush1.bf16.msra.mxu0 0
        %1370 = vmatprep.mubr.bf16.mxu0 0
        %1371 = vmatmul.mubr.bf16.gmra.mrb[0].mxu0 %v1333
        %v1372 = vpop.f32.mrb[0].mxu0
        %v1373 = vadd.f32 0.0, %v1372
        %v1374 = vpop.f32.mrb[0].mxu0
        %v1375 = vpop.f32.mrb[0].mxu0
        %v1376 = vpop.f32.mrb[0].mxu0
        %1377 = vdwg.mxu0
        %1378 = vrot.lane.b32.xlu0 %v544, 40
        %v1379 = vpop.permute.xlu0 %1378
        %v1381 = vsel %vm547, %v1329, 0
        %v1384 = vsel %vm671, %v1379, 0
        %1386 = vmatprep.subr.bf16.mxu0 0
        %1387 = vmatpush1.bf16.msra.mxu0 %v1384
        %1388 = vmatprep.subr.bf16.mxu0 0
        %1389 = vmatpush1.bf16.msra.mxu0 0
        %1390 = vmatprep.subr.bf16.mxu0 0
        %1391 = vmatpush1.bf16.msra.mxu0 0
        %1392 = vmatprep.subr.bf16.mxu0 0
        %1393 = vmatpush1.bf16.msra.mxu0 0
        %1394 = vmatprep.subr.bf16.mxu0 0
        %1395 = vmatpush1.bf16.msra.mxu0 0
        %1396 = vmatprep.subr.bf16.mxu0 0
        %1397 = vmatpush1.bf16.msra.mxu0 0
        %1398 = vmatprep.subr.bf16.mxu0 0
        %1399 = vmatpush1.bf16.msra.mxu0 0
        %1400 = vmatprep.subr.bf16.mxu0 0
        %1401 = vmatpush1.bf16.msra.mxu0 0
        %1402 = vmatprep.subr.bf16.mxu0 0
        %1403 = vmatpush1.bf16.msra.mxu0 0
        %1404 = vmatprep.subr.bf16.mxu0 0
        %1405 = vmatpush1.bf16.msra.mxu0 0
        %1406 = vmatprep.subr.bf16.mxu0 0
        %1407 = vmatpush1.bf16.msra.mxu0 0
        %1408 = vmatprep.subr.bf16.mxu0 0
        %1409 = vmatpush1.bf16.msra.mxu0 0
        %1410 = vmatprep.subr.bf16.mxu0 0
        %1411 = vmatpush1.bf16.msra.mxu0 0
        %1412 = vmatprep.subr.bf16.mxu0 0
        %1413 = vmatpush1.bf16.msra.mxu0 0
        %1414 = vmatprep.subr.bf16.mxu0 0
        %1415 = vmatpush1.bf16.msra.mxu0 0
        %1416 = vmatprep.subr.bf16.mxu0 0
        %1417 = vmatpush1.bf16.msra.mxu0 0
        %1418 = vmatprep.mubr.bf16.mxu0 0
        %1419 = vmatmul.mubr.bf16.gmra.mrb[0].mxu0 %v1381
        %v1420 = vpop.f32.mrb[0].mxu0
        %v1421 = vadd.f32 0.0, %v1420
        %v1422 = vpop.f32.mrb[0].mxu0
        %v1423 = vpop.f32.mrb[0].mxu0
        %v1424 = vpop.f32.mrb[0].mxu0
        %1425 = vdwg.mxu0
        %v1426 = vpack.c.bf16 %v1421, %v1373
        %1428 = vrot.lane.b32.xlu0 %v984, 8
        %v1429 = vpop.permute.xlu0 %1428
        %1431 = vrot.lane.b32.xlu0 %v1205, 16
        %v1432 = vpop.permute.xlu0 %1431
        %1434 = vrot.lane.b32.xlu0 %v1426, 24
        %v1435 = vpop.permute.xlu0 %1434
        %v1438 = vsel %vm547, %v763, %v1429
        %vm1439 = vcmask 130048
        %v1441 = vsel %vm1439, %v1438, %v1432
        %vm1442 = vcmask 195584
        %v1444 = vsel %vm1442, %v1441, %v1435
        %v1445 = vld [vmem:[%s441] sm:$0xf]
        %v1446 = vld [vmem:[%s441 + $0x4] sm:$0xf]
        %v1447 = vld [vmem:[%s441 + $0x8] sm:$0xf]
        %v1448 = vld [vmem:[%s441 + $0xc] sm:$0xf]
        %v1449 = vlaneseq
        %v1450 = vshrl.u32 %v1449, 7
        %v1451 = vsub.s32 0, %v1450
        %v1452 = vrot.slane %v469, %v1451
        %v1457 = vunpack.c.l.b16 %v1445
        %v1458 = vunpack.c.l.b16 %v1446
        %v1459 = vunpack.c.l.b16 %v1447
        %v1460 = vunpack.c.l.b16 %v1448
        %v1461 = vpack.c.b16 %v1458, %v1457
        %v1462 = vpack.c.b16 %v1460, %v1459
        %v1465 = vsel %vm494, %v1444, 0
        %1467 = vmatprep.subr.bf16.mxu0 0
        %1468 = vmatpush1.bf16.msra.mxu0 %v1461
        %1469 = vmatprep.subr.bf16.mxu0 0
        %1470 = vmatpush1.bf16.msra.mxu0 %v1462
        %1471 = vmatprep.subr.bf16.mxu0 0
        %1472 = vmatpush1.bf16.msra.mxu0 0
        %1473 = vmatprep.subr.bf16.mxu0 0
        %1474 = vmatpush1.bf16.msra.mxu0 0
        %1475 = vmatprep.subr.bf16.mxu0 0
        %1476 = vmatpush1.bf16.msra.mxu0 0
        %1477 = vmatprep.subr.bf16.mxu0 0
        %1478 = vmatpush1.bf16.msra.mxu0 0
        %1479 = vmatprep.subr.bf16.mxu0 0
        %1480 = vmatpush1.bf16.msra.mxu0 0
        %1481 = vmatprep.subr.bf16.mxu0 0
        %1482 = vmatpush1.bf16.msra.mxu0 0
        %1483 = vmatprep.subr.bf16.mxu0 0
        %1484 = vmatpush1.bf16.msra.mxu0 0
        %1485 = vmatprep.subr.bf16.mxu0 0
        %1486 = vmatpush1.bf16.msra.mxu0 0
        %1487 = vmatprep.subr.bf16.mxu0 0
        %1488 = vmatpush1.bf16.msra.mxu0 0
        %1489 = vmatprep.subr.bf16.mxu0 0
        %1490 = vmatpush1.bf16.msra.mxu0 0
        %1491 = vmatprep.subr.bf16.mxu0 0
        %1492 = vmatpush1.bf16.msra.mxu0 0
        %1493 = vmatprep.subr.bf16.mxu0 0
        %1494 = vmatpush1.bf16.msra.mxu0 0
        %1495 = vmatprep.subr.bf16.mxu0 0
        %1496 = vmatpush1.bf16.msra.mxu0 0
        %1497 = vmatprep.subr.bf16.mxu0 0
        %1498 = vmatpush1.bf16.msra.mxu0 0
        %1499 = vmatprep.mubr.bf16.mxu0 0
        %1500 = vmatmul.mubr.bf16.gmra.mrb[0].mxu0 %v1465
        %v1501 = vpop.f32.mrb[0].mxu0
        %v1502 = vadd.f32 %v1452, %v1501
        %v1503 = vpop.f32.mrb[0].mxu0
        %v1504 = vpop.f32.mrb[0].mxu0
        %v1505 = vadd.f32 %v1452, %v1504
        %v1506 = vpop.f32.mrb[0].mxu0
        %1507 = vdwg.mxu0
        %v1508 = vadd.f32 %v467, %v1502
        %v1509 = vadd.f32 %v468, %v1505
        %v1510 = vsel %vm494, %v1508, 0.0
        %1511 = vadd.xlane.f32.xlu0 %v1510
        %v1512 = vpop.xlane.xlu0 %1511
        %v1513 = vsel %vm494, %v1509, 0.0
        %1514 = vadd.xlane.f32.xlu0 %v1513
        %v1515 = vpop.xlane.xlu0 %1514
        %v1516 = vrcp.pop 32.0
        %v1517 = vmul.f32 %v1512, %v1516
        %v1518 = vmul.f32 %v1515, %v1516
        %v1519 = vsub.f32 %v1508, %v1517
        %v1520 = vsub.f32 %v1509, %v1518
        %v1521 = vmul.f32 %v1519, %v1519
        %v1522 = vmul.f32 %v1520, %v1520
        %v1523 = vsel %vm494, %v1521, 0.0
        %1524 = vadd.xlane.f32.xlu0 %v1523
        %v1525 = vpop.xlane.xlu0 %1524
        %v1526 = vsel %vm494, %v1522, 0.0
        %1527 = vadd.xlane.f32.xlu0 %v1526
        %v1528 = vpop.xlane.xlu0 %1527
        %v1529 = vmul.f32 %v1525, %v1516
        %v1530 = vmul.f32 %v1528, %v1516
        %v1531 = vadd.f32 %v1529, 1e-05
        %v1532 = vadd.f32 %v1530, 1e-05
        %v1533 = vrsqrt.pop %v1531
        %v1534 = vrsqrt.pop %v1532
        %v1535 = vmul.f32 %v1519, %v1533
        %v1536 = vmul.f32 %v1520, %v1534
        %v1537 = vlaneseq
        %v1538 = vshrl.u32 %v1537, 7
        %v1539 = vsub.s32 2, %v1538
        %v1540 = vrot.slane %v469, %v1539
        %v1541 = vmul.f32 %v1535, %v1540
        %v1542 = vmul.f32 %v1536, %v1540
        %v1543 = vlaneseq
        %v1544 = vshrl.u32 %v1543, 7
        %v1545 = vsub.s32 3, %v1544
        %v1546 = vrot.slane %v469, %v1545
        %v1547 = vadd.f32 %v1541, %v1546
        %v1548 = vadd.f32 %v1542, %v1546
        %v1549 = vpack.c.bf16 %v1548, %v1547
        %v1550 = vld [vmem:[%s446] sm:$0xf]
        %v1551 = vld [vmem:[%s446 + $0x4] sm:$0xf]
        %v1552 = vld [vmem:[%s446 + $0x8] sm:$0xf]
        %v1553 = vld [vmem:[%s446 + $0xc] sm:$0xf]
        %v1554 = vld [vmem:[%s364] sm:$0x1]
        %v1556 = vlaneseq
        %v1557 = vshrl.u32 %v1556, 7
        %v1558 = vsub.s32 0, %v1557
        %v1559 = vrot.slane %v1554, %v1558
        %v1565 = vunpack.c.l.b16 %v1550
        %v1566 = vunpack.c.l.b16 %v1551
        %v1567 = vunpack.c.l.b16 %v1552
        %v1568 = vunpack.c.l.b16 %v1553
        %v1569 = vpack.c.b16 %v1566, %v1565
        %v1570 = vpack.c.b16 %v1568, %v1567
        %v1574 = vsel %vm494, %v1549, 0
        %1576 = vmatprep.subr.bf16.mxu0 0
        %1577 = vmatpush1.bf16.msra.mxu0 %v1569
        %1578 = vmatprep.subr.bf16.mxu0 0
        %1579 = vmatpush1.bf16.msra.mxu0 %v1570
        %1580 = vmatprep.subr.bf16.mxu0 0
        %1581 = vmatpush1.bf16.msra.mxu0 0
        %1582 = vmatprep.subr.bf16.mxu0 0
        %1583 = vmatpush1.bf16.msra.mxu0 0
        %1584 = vmatprep.subr.bf16.mxu0 0
        %1585 = vmatpush1.bf16.msra.mxu0 0
        %1586 = vmatprep.subr.bf16.mxu0 0
        %1587 = vmatpush1.bf16.msra.mxu0 0
        %1588 = vmatprep.subr.bf16.mxu0 0
        %1589 = vmatpush1.bf16.msra.mxu0 0
        %1590 = vmatprep.subr.bf16.mxu0 0
        %1591 = vmatpush1.bf16.msra.mxu0 0
        %1592 = vmatprep.subr.bf16.mxu0 0
        %1593 = vmatpush1.bf16.msra.mxu0 0
        %1594 = vmatprep.subr.bf16.mxu0 0
        %1595 = vmatpush1.bf16.msra.mxu0 0
        %1596 = vmatprep.subr.bf16.mxu0 0
        %1597 = vmatpush1.bf16.msra.mxu0 0
        %1598 = vmatprep.subr.bf16.mxu0 0
        %1599 = vmatpush1.bf16.msra.mxu0 0
        %1600 = vmatprep.subr.bf16.mxu0 0
        %1601 = vmatpush1.bf16.msra.mxu0 0
        %1602 = vmatprep.subr.bf16.mxu0 0
        %1603 = vmatpush1.bf16.msra.mxu0 0
        %1604 = vmatprep.subr.bf16.mxu0 0
        %1605 = vmatpush1.bf16.msra.mxu0 0
        %1606 = vmatprep.subr.bf16.mxu0 0
        %1607 = vmatpush1.bf16.msra.mxu0 0
        %1608 = vmatprep.mubr.bf16.mxu0 0
        %1609 = vmatmul.mubr.bf16.gmra.mrb[0].mxu0 %v1574
        %v1610 = vpop.f32.mrb[0].mxu0
        %v1611 = vadd.f32 %v1559, %v1610
        %v1612 = vpop.f32.mrb[0].mxu0
        %v1613 = vpop.f32.mrb[0].mxu0
        %v1614 = vadd.f32 %v1559, %v1613
        %v1615 = vpop.f32.mrb[0].mxu0
        %1616 = vdwg.mxu0
        %v1617 = vmax.f32 %v1611, 0.0
        %v1618 = vmax.f32 %v1614, 0.0
        %v1619 = vpack.c.bf16 %v1618, %v1617
        %v1620 = vld [vmem:[%s451] sm:$0xf]
        %v1621 = vld [vmem:[%s451 + $0x4] sm:$0xf]
        %v1622 = vld [vmem:[%s451 + $0x8] sm:$0xf]
        %v1623 = vld [vmem:[%s451 + $0xc] sm:$0xf]
        %v1624 = vld [vmem:[%s451 + $0x10] sm:$0xf]
        %v1625 = vld [vmem:[%s451 + $0x14] sm:$0xf]
        %v1626 = vld [vmem:[%s451 + $0x18] sm:$0xf]
        %v1627 = vld [vmem:[%s451 + $0x1c] sm:$0xf]
        %v1628 = vlaneseq
        %v1629 = vshrl.u32 %v1628, 7
        %v1630 = vsub.s32 1, %v1629
        %v1631 = vrot.slane %v469, %v1630
        %v1640 = vunpack.c.l.b16 %v1620
        %v1641 = vunpack.c.l.b16 %v1621
        %v1642 = vunpack.c.l.b16 %v1622
        %v1643 = vunpack.c.l.b16 %v1623
        %v1644 = vunpack.c.l.b16 %v1624
        %v1645 = vunpack.c.l.b16 %v1625
        %v1646 = vunpack.c.l.b16 %v1626
        %v1647 = vunpack.c.l.b16 %v1627
        %v1648 = vpack.c.b16 %v1641, %v1640
        %v1649 = vpack.c.b16 %v1643, %v1642
        %v1650 = vpack.c.b16 %v1645, %v1644
        %v1651 = vpack.c.b16 %v1647, %v1646
        %vm1656 = vcmask 523264
        %v1658 = vsel %vm1656, %v1619, 0
        %1660 = vmatprep.subr.bf16.mxu0 0
        %1661 = vmatpush1.bf16.msra.mxu0 %v1648
        %1662 = vmatprep.subr.bf16.mxu0 0
        %1663 = vmatpush1.bf16.msra.mxu0 %v1649
        %1664 = vmatprep.subr.bf16.mxu0 0
        %1665 = vmatpush1.bf16.msra.mxu0 %v1650
        %1666 = vmatprep.subr.bf16.mxu0 0
        %1667 = vmatpush1.bf16.msra.mxu0 %v1651
        %1668 = vmatprep.subr.bf16.mxu0 0
        %1669 = vmatpush1.bf16.msra.mxu0 0
        %1670 = vmatprep.subr.bf16.mxu0 0
        %1671 = vmatpush1.bf16.msra.mxu0 0
        %1672 = vmatprep.subr.bf16.mxu0 0
        %1673 = vmatpush1.bf16.msra.mxu0 0
        %1674 = vmatprep.subr.bf16.mxu0 0
        %1675 = vmatpush1.bf16.msra.mxu0 0
        %1676 = vmatprep.subr.bf16.mxu0 0
        %1677 = vmatpush1.bf16.msra.mxu0 0
        %1678 = vmatprep.subr.bf16.mxu0 0
        %1679 = vmatpush1.bf16.msra.mxu0 0
        %1680 = vmatprep.subr.bf16.mxu0 0
        %1681 = vmatpush1.bf16.msra.mxu0 0
        %1682 = vmatprep.subr.bf16.mxu0 0
        %1683 = vmatpush1.bf16.msra.mxu0 0
        %1684 = vmatprep.subr.bf16.mxu0 0
        %1685 = vmatpush1.bf16.msra.mxu0 0
        %1686 = vmatprep.subr.bf16.mxu0 0
        %1687 = vmatpush1.bf16.msra.mxu0 0
        %1688 = vmatprep.subr.bf16.mxu0 0
        %1689 = vmatpush1.bf16.msra.mxu0 0
        %1690 = vmatprep.subr.bf16.mxu0 0
        %1691 = vmatpush1.bf16.msra.mxu0 0
        %1692 = vmatprep.mubr.bf16.mxu0 0
        %1693 = vmatmul.mubr.bf16.gmra.mrb[0].mxu0 %v1658
        %v1694 = vpop.f32.mrb[0].mxu0
        %v1695 = vadd.f32 %v1631, %v1694
        %v1696 = vpop.f32.mrb[0].mxu0
        %v1697 = vpop.f32.mrb[0].mxu0
        %v1698 = vadd.f32 %v1631, %v1697
        %v1699 = vpop.f32.mrb[0].mxu0
        %1700 = vdwg.mxu0
        %v1701 = vadd.f32 %v1547, %v1695
        %v1702 = vadd.f32 %v1548, %v1698
        %v1703 = vsel %vm494, %v1701, 0.0
        %1704 = vadd.xlane.f32.xlu0 %v1703
        %v1705 = vpop.xlane.xlu0 %1704
        %v1706 = vsel %vm494, %v1702, 0.0
        %1707 = vadd.xlane.f32.xlu0 %v1706
        %v1708 = vpop.xlane.xlu0 %1707
        %v1709 = vmul.f32 %v1705, %v1516
        %v1710 = vmul.f32 %v1708, %v1516
        %v1711 = vsub.f32 %v1701, %v1709
        %v1712 = vsub.f32 %v1702, %v1710
        %v1713 = vmul.f32 %v1711, %v1711
        %v1714 = vmul.f32 %v1712, %v1712
        %v1715 = vsel %vm494, %v1713, 0.0
        %1716 = vadd.xlane.f32.xlu0 %v1715
        %v1717 = vpop.xlane.xlu0 %1716
        %v1718 = vsel %vm494, %v1714, 0.0
        %1719 = vadd.xlane.f32.xlu0 %v1718
        %v1720 = vpop.xlane.xlu0 %1719
        %v1721 = vmul.f32 %v1717, %v1516
        %v1722 = vmul.f32 %v1720, %v1516
        %v1723 = vadd.f32 %v1721, 1e-05
        %v1724 = vadd.f32 %v1722, 1e-05
        %v1725 = vrsqrt.pop %v1723
        %v1726 = vrsqrt.pop %v1724
        %v1727 = vmul.f32 %v1711, %v1725
        %v1728 = vmul.f32 %v1712, %v1726
        %v1729 = vlaneseq
        %v1730 = vshrl.u32 %v1729, 7
        %v1731 = vsub.s32 4, %v1730
        %v1732 = vrot.slane %v469, %v1731
        %v1733 = vmul.f32 %v1727, %v1732
        %v1734 = vmul.f32 %v1728, %v1732
        %v1735 = vlaneseq
        %v1736 = vshrl.u32 %v1735, 7
        %v1737 = vsub.s32 5, %v1736
        %v1738 = vrot.slane %v469, %v1737
        %v1739 = vadd.f32 %v1733, %v1738
        %v1740 = vadd.f32 %v1734, %v1738
        %1741 = vst.msk [vmem:[#allocation2] sm:$0xff] %vm494, %v1739
        %1742 = vst.msk [vmem:[#allocation2 + $0x8] sm:$0xff] %vm494, %v1740
        %p1743 = scmp.eq.s32.totalorder %s28, 1
        // Predicated region
        $region61: #{tpu_custom_call.1} parent=51 // pred_check
          %p1744 = pneg %p1743
        $region62: #{tpu_custom_call.1} parent=51 // pred_check_branch
          %1746 = sbr.rel (%p1744) target = $region64
        $region63: #{tpu_custom_call.1} parent=51 // pred_region
          %1747 = vst.msk [vmem:[#allocation6] sm:$0xff] %vm494, %v1739
          %1748 = vst.msk [vmem:[#allocation6 + $0x8] sm:$0xff] %vm494, %v1740
        $region64: #{tpu_custom_call.1} parent=51 // pred_fallthru
          _
        // Predicated region
        $region65: #{tpu_custom_call.1} parent=51 // pred_check
          %p1749 = pneg %p261
        $region66: #{tpu_custom_call.1} parent=51 // pred_check_branch
          %1751 = sbr.rel (%p1749) target = $region68
        $region67: #{tpu_custom_call.1} parent=51 // pred_region
          %s1752 = smul.u32 2, %s27
          %s1754 = ssub.s32 256, 256
          %1755 = vsyncadd [#allocation5], %s1754
          %s1756 = smul.addr %s1752, 128
          %s1757 = scalar_lea.hbm %s8, %s1756
          %s1758 = sshll.u32 [#allocation6], 4
          %s1759 = int_to_ptr.vmem [resolvable:$true] %s1758
          %1764 = dma.vmem_to_hbm [thread:$0]  %s1759, 256, %s1757, [#allocation5], 128, 128, 8
        $region68: #{tpu_custom_call.1} parent=51 // pred_fallthru
          _
        // Predicated region
        $region69: #{tpu_custom_call.1} parent=51 // pred_check
          %p1765 = pneg %p261
        $region70: #{tpu_custom_call.1} parent=51 // pred_check_branch
          %1767 = sbr.rel (%p1765) target = $region72
        $region71: #{tpu_custom_call.1} parent=51 // pred_region
          %1768 = dma.done [#allocation5], 256
        $region72: #{tpu_custom_call.1} parent=51 // pred_fallthru
          _
      $region52: #{tpu_custom_call.1} parent=5 // pred_fallthru
        _
      %p1769 = scmp.le.s32.totalorder 2, %s18
      // Predicated region
      $region73: #{tpu_custom_call.1} parent=5 // pred_check
        %p1770 = pneg %p1769
      $region74: #{tpu_custom_call.1} parent=5 // pred_check_branch
        %1772 = sbr.rel (%p1770) target = $region76
      $region75: #{tpu_custom_call.1} parent=5 // pred_region
        %s1773 = ssub.s32 %s18, 2
      $region76: #{tpu_custom_call.1} parent=5 // pred_fallthru
        _
    $region6: #{tpu_custom_call.1} parent=1 // loop_footer
      %s22 = sadd.s32 1, %s18
    $region7: #{tpu_custom_call.1} parent=1 // loop_footer_branch
      %17 = sbr.rel target = $region3
    $region8: #{tpu_custom_call.1} parent=1 // loop_exit
      _
    %1774 = vsyncpa [#allocation4], 1
    %s1775 = scalar_lea.sflag [#allocation4], 1
    %1776 = vsyncpa %s1775, 1
    %1777 = vsyncpa [#allocation5], 1
    %s1778 = scalar_lea.sflag [#allocation5], 1
    %1779 = vsyncpa %s1778, 1

</llo_original>
